<compile_context>
chip_gen: v7x
topology: tpu7x:2x2x1
jax: 0.10.0
libtpu: 0.0.40
codegen_flags: <defaults>
</compile_context>

<pallas_src>
import functools

import jax
import jax.numpy as jnp
from jax import lax
from jax.experimental import pallas as pl
from jax.experimental.pallas import tpu as pltpu


def _round_up(x, m):
    return (x + m - 1) // m * m


# ----------------------------------------------------------------------------
# Pallas kernel: vocab-tiled projection + online greedy argmax
# ----------------------------------------------------------------------------
def _greedy_decode_kernel(x_ref, w_ref, tok_ref, score_ref, max_sc, idx_sc,
                          *, v_actual, v_tile, mask_tail):
    # x_ref:     (H, M_TILE)     bf16  hidden states, transposed (lane dim = M)
    # w_ref:     (V_TILE, H)     bf16  output-projection rows for this vocab tile
    # tok_ref:   (1, M_TILE)     int32 argmax token ids   (written on last V step)
    # score_ref: (1, M_TILE)     f32   max logit          (written on last V step)
    # max_sc / idx_sc: (1, M_TILE) running online-argmax state across V tiles
    k = pl.program_id(1)

    @pl.when(k == 0)
    def _init():
        max_sc[...] = jnp.full_like(max_sc, -jnp.inf)
        idx_sc[...] = jnp.zeros_like(idx_sc)

    # (V_TILE, H) @ (H, M_TILE) -> (V_TILE, M_TILE); bf16 MXU, f32 accumulate.
    logits_t = jnp.dot(w_ref[...], x_ref[...],
                       preferred_element_type=jnp.float32)

    # Global vocab row ids for this tile (sublane iota + scalar tile offset).
    row_ids = lax.broadcasted_iota(jnp.int32, logits_t.shape, 0) + k * v_tile
    if mask_tail:  # static Python bool: only emitted when vocab was padded
        logits_t = jnp.where(row_ids < v_actual, logits_t, -jnp.inf)

    local_max = jnp.max(logits_t, axis=0, keepdims=True)             # (1, M_TILE)
    local_idx = jnp.min(
        jnp.where(logits_t == local_max, row_ids, jnp.int32(2 ** 30)),
        axis=0, keepdims=True)                                       # (1, M_TILE)

    # Strict '>' keeps first-occurrence tie-breaking across V tiles
    # (within a tile, min-over-global-row-ids already picks the lowest index).
    better = local_max > max_sc[...]
    idx_sc[...] = jnp.where(better, local_idx, idx_sc[...])
    max_sc[...] = jnp.where(better, local_max, max_sc[...])

    @pl.when(k == pl.num_programs(1) - 1)
    def _finalize():
        tok_ref[...] = idx_sc[...]
        score_ref[...] = max_sc[...]


@jax.jit
def _greedy_decode(hidden_states, weight_vh):
    """hidden_states: [B, S, H] float; weight_vh: [V, H] bf16 (nn.Linear layout).

    Returns (tokens [B, S] int32, scores [B, S] float32 = max logit).
    """
    B, S, H = hidden_states.shape
    V = weight_vh.shape[0]
    M = B * S

    LANE = 128
    M_TILE = 128                       # MXU-row friendly on v5e/v6e/v7x
    V_pad0 = _round_up(V, LANE)
    V_TILE = min(1024, V_pad0)         # keeps double-buffered bf16 W tiles small
    V_pad = _round_up(V_pad0, V_TILE)
    M_pad = _round_up(M, M_TILE)

    # Layout plumbing outside the kernel: lane-dense x^T, padded bf16 weights.
    x_flat = hidden_states.reshape(M, H).astype(jnp.bfloat16)
    x_t = jnp.pad(x_flat, ((0, M_pad - M), (0, 0))).T          # (H, M_pad)
    w_p = weight_vh.astype(jnp.bfloat16)
    if V_pad != V:
        w_p = jnp.pad(w_p, ((0, V_pad - V), (0, 0)))           # (V_pad, H)

    grid = (M_pad // M_TILE, V_pad // V_TILE)

    kernel = functools.partial(
        _greedy_decode_kernel,
        v_actual=V, v_tile=V_TILE, mask_tail=(V_pad != V))

    # VMEM budget: double-buffered inputs + f32 logits tile + scratch + slack.
    need = (2 * (V_TILE * H * 2 + H * M_TILE * 2)
            + V_TILE * M_TILE * 4 + 8 * M_TILE * 8 + (1 << 20))
    vmem_limit = int(max(16 * 2 ** 20, min(48 * 2 ** 20, 4 * need)))

    cost = pl.CostEstimate(
        flops=2 * M_pad * H * V_pad,
        transcendentals=0,
        bytes_accessed=(H * M_pad * 2) + (V_pad * H * 2) + (2 * M_pad * 4),
    )

    tokens, scores = pl.pallas_call(
        kernel,
        out_shape=(
            jax.ShapeDtypeStruct((1, M_pad), jnp.int32),
            jax.ShapeDtypeStruct((1, M_pad), jnp.float32),
        ),
        grid=grid,
        in_specs=[
            pl.BlockSpec((H, M_TILE), lambda i, k: (0, i)),   # x^T  (resident over k)
            pl.BlockSpec((V_TILE, H), lambda i, k: (k, 0)),   # W    (streamed over k)
        ],
        out_specs=[
            pl.BlockSpec((1, M_TILE), lambda i, k: (0, i)),
            pl.BlockSpec((1, M_TILE), lambda i, k: (0, i)),
        ],
        scratch_shapes=[
            pltpu.VMEM((1, M_TILE), jnp.float32),   # running max
            pltpu.VMEM((1, M_TILE), jnp.int32),     # running argmax
        ],
        compiler_params=pltpu.CompilerParams(
            dimension_semantics=("parallel", "arbitrary"),
            vmem_limit_bytes=vmem_limit,
        ),
        cost_estimate=cost,
    )(x_t, w_p)

    tokens = tokens[0, :M].reshape(B, S)
    scores = scores[0, :M].reshape(B, S)
    return tokens, scores


# ----------------------------------------------------------------------------
# Synthetic per-task sequence generator (stands in for fairseq SequenceGenerator)
# ----------------------------------------------------------------------------
class SyntheticSequenceGenerator:
    def __init__(self, name: str, hidden: int, vocab: int, seed: int,
                 eos: int = 2, symbols_to_strip=None):
        key = jax.random.PRNGKey(seed)
        # nn.Linear layout [vocab, hidden]; stored bf16 since weight streaming
        # is the bandwidth bottleneck and bf16 feeds the MXU at full rate.
        # TODO(synk): int8 (v5e/v6e) / fp8 (v7x) quantized-weight branch with
        # per-tensor scales (argmax-safe) is not implemented here.
        self.weight = (jax.random.normal(key, (vocab, hidden), jnp.float32)
                       / jnp.sqrt(jnp.float32(hidden))).astype(jnp.bfloat16)
        self.name = name
        self._eos = eos
        self._symbols_to_strip = symbols_to_strip or {eos}

    def generate(self, hidden_states):
        """hidden_states: [batch, seq, hidden] -> dict with tokens/scores."""
        tokens, scores = _greedy_decode(hidden_states, self.weight)
        # TODO(synk): fairseq positional_scores are log-probs; raw max logits are
        # returned here (a log-softmax would need an online logsumexp over V).
        return {"tokens": tokens, "positional_scores": scores}

    def cuda(self):  # interface parity; no-op on JAX/TPU
        return self

    @property
    def eos(self):
        return self._eos

    @property
    def symbols_to_strip_from_output(self):
        return self._symbols_to_strip


# ----------------------------------------------------------------------------
# JointGenerator: dispatch semantics mirrored from the PyTorch module
# ----------------------------------------------------------------------------
class JointGenerator:
    def __init__(self, generators: dict, main_task_name: str):
        self.generators = generators
        self.main_task_name = main_task_name
        self.main_task_name_cache = None

    @classmethod
    def build_generator(cls, task_specs: dict, main_task_name: str):
        generators = {}
        for _name, spec in task_specs.items():
            generators[_name] = SyntheticSequenceGenerator(
                _name, spec["hidden"], spec["vocab"], seed=spec["seed"])
        return cls(generators, main_task_name)

    def cuda(self):
        for _generator in self.generators.values():
            _generator.cuda()
        return self

    def forward(self, *args, **kwargs):
        # Matches the PyTorch module: forward is intentionally unimplemented.
        raise NotImplementedError()

    def generate(self, task_name: str, *args, **kwargs):
        local_generator = self.generators[task_name]
        return local_generator.generate(*args, **kwargs)

    @property
    def main_generator(self):
        return self.generators[self.main_task_name]

    @property
    def symbols_to_strip_from_output(self):
        return self.main_generator.symbols_to_strip_from_output

    @property
    def eos(self):
        return self.main_generator.eos


# ----------------------------------------------------------------------------
# Demo / smoke test
# ----------------------------------------------------------------------------
if __name__ == "__main__":
    # Small shapes; V=2000 is deliberately not a lane multiple and spans two
    # V tiles, exercising both the online-argmax accumulator and tail masking.
    B, S, H, V = 2, 8, 32, 2000

    task_specs = {
        "translation":   {"hidden": H, "vocab": V, "seed": 1},
        "summarization": {"hidden": H, "vocab": V, "seed": 2},
    }
    joint = JointGenerator.build_generator(task_specs, main_task_name="translation")

    key = jax.random.PRNGKey(0)
    hidden_states = jax.random.normal(key, (B, S, H), jnp.float32)

    # Dispatch through JointGenerator.generate (hot path runs in the Pallas kernel)
    out_main = joint.generate("translation", hidden_states)
    out_aux = joint.generate("summarization", hidden_states)
    jax.block_until_ready(out_main["tokens"])
    jax.block_until_ready(out_aux["tokens"])

    # Sanity check against a pure-JAX reference (same bf16 inputs).
    w_f32 = joint.main_generator.weight.astype(jnp.float32)            # (V, H)
    x_f32 = hidden_states.astype(jnp.bfloat16).astype(jnp.float32)
    logits_ref = jnp.einsum("bsh,vh->bsv", x_f32, w_f32)
    ref_tokens = jnp.argmax(logits_ref, axis=-1).astype(jnp.int32)
    ref_scores = jnp.max(logits_ref, axis=-1)
    assert bool(jnp.all(out_main["tokens"] == ref_tokens))
    assert bool(jnp.all(jnp.abs(out_main["positional_scores"] - ref_scores) < 1e-3))

    # Exercise the dispatcher properties (parity with the torch module)
    _ = joint.main_generator
    _ = joint.eos
    _ = joint.symbols_to_strip_from_output
    _ = joint.cuda()

    # forward() must raise, like the original
    try:
        joint.forward(hidden_states)
        raise AssertionError("forward should have raised NotImplementedError")
    except NotImplementedError:
        pass

    print("KERNEL_OK")
</pallas_src>

<mosaic_0001>
module attributes {stable_mosaic.version = 11 : i64} {
  func.func @_greedy_decode_kernel(%arg0: i32, %arg1: i32, %arg2: memref<32x128xbf16, #tpu.memory_space<vmem>>, %arg3: memref<1024x32xbf16, #tpu.memory_space<vmem>>, %arg4: memref<1x128xi32, #tpu.memory_space<vmem>>, %arg5: memref<1x128xf32, #tpu.memory_space<vmem>>, %arg6: memref<1x128xf32, #tpu.memory_space<vmem>>, %arg7: memref<1x128xi32, #tpu.memory_space<vmem>>) attributes {dimension_semantics = [#tpu.dimension_semantics<parallel>, #tpu.dimension_semantics<arbitrary>], iteration_bounds = array<i64: 1, 2>, scalar_prefetch = 0 : i64, scratch_operands = 2 : i64, tpu.core_type = #tpu.core_type<tc>, window_params = [{transform_indices = @transform_0, window_bounds = array<i64: 32, 128>}, {transform_indices = @transform_1, window_bounds = array<i64: 1024, 32>}, {transform_indices = @transform_2, window_bounds = array<i64: 1, 128>}, {transform_indices = @transform_3, window_bounds = array<i64: 1, 128>}]} {
    %c0_i32 = arith.constant 0 : i32
    %0 = arith.cmpi eq, %arg1, %c0_i32 : i32
    %1 = arith.extui %0 : i1 to i32
    %c0_i32_0 = arith.constant 0 : i32
    %2 = arith.cmpi ne, %1, %c0_i32_0 : i32
    scf.if %2 {
      %cst_18 = arith.constant 0xFF800000 : f32
      %33 = vector.broadcast %cst_18 : f32 to vector<1x128xf32>
      %c0_19 = arith.constant 0 : index
      %c0_20 = arith.constant 0 : index
      %34 = vector.load %arg6[%c0_19, %c0_20] : memref<1x128xf32, #tpu.memory_space<vmem>>, vector<1x128xf32>
      tpu.vector_store %arg6[%c0_19, %c0_20], %33 {strides = array<i32>} : memref<1x128xf32, #tpu.memory_space<vmem>>, vector<1x128xf32>,
      %c0_i32_21 = arith.constant 0 : i32
      %35 = vector.broadcast %c0_i32_21 : i32 to vector<1x128xi32>
      %c0_22 = arith.constant 0 : index
      %c0_23 = arith.constant 0 : index
      %36 = vector.load %arg7[%c0_22, %c0_23] : memref<1x128xi32, #tpu.memory_space<vmem>>, vector<1x128xi32>
      tpu.vector_store %arg7[%c0_22, %c0_23], %35 {strides = array<i32>} : memref<1x128xi32, #tpu.memory_space<vmem>>, vector<1x128xi32>,
    } else {
    }
    %c0 = arith.constant 0 : index
    %c0_1 = arith.constant 0 : index
    %3 = vector.load %arg3[%c0, %c0_1] : memref<1024x32xbf16, #tpu.memory_space<vmem>>, vector<1024x32xbf16>
    %c0_2 = arith.constant 0 : index
    %c0_3 = arith.constant 0 : index
    %4 = vector.load %arg2[%c0_2, %c0_3] : memref<32x128xbf16, #tpu.memory_space<vmem>>, vector<32x128xbf16>
    %cst = arith.constant dense<0.000000e+00> : vector<1024x128xf32>
    %5 = tpu.matmul %3, %4, %cst {dimension_numbers = #tpu.dot_dimension_numbers<[1], [0], [0], [1], [0, 0, 1, 1], [], []>} : vector<1024x32xbf16>, vector<32x128xbf16>, vector<1024x128xf32> -> vector<1024x128xf32>
    %6 = tpu.iota {dimensions = array<i32: 0>} : vector<1024x128xi32>
    %c1024_i32 = arith.constant 1024 : i32
    %7 = arith.muli %arg1, %c1024_i32 : i32
    %8 = vector.broadcast %7 : i32 to vector<1024x128xi32>
    %9 = arith.addi %6, %8 : vector<1024x128xi32>
    %c2000_i32 = arith.constant 2000 : i32
    %10 = vector.broadcast %c2000_i32 : i32 to vector<1024x128xi32>
    %11 = arith.cmpi slt, %9, %10 : vector<1024x128xi32>
    %cst_4 = arith.constant 0xFF800000 : f32
    %12 = vector.broadcast %cst_4 : f32 to vector<1024x128xf32>
    %13 = arith.select %11, %5, %12 : vector<1024x128xi1>, vector<1024x128xf32>
    %cst_5 = arith.constant dense<0xFF800000> : vector<128xf32>
    %14 = vector.multi_reduction <maximumf>, %13, %cst_5 [0] : vector<1024x128xf32> to vector<128xf32>
    %15 = vector.shape_cast %14 : vector<128xf32> to vector<1x128xf32>
    %16 = vector.broadcast %15 : vector<1x128xf32> to vector<1024x128xf32>
    %17 = arith.cmpf oeq, %13, %16 : vector<1024x128xf32>
    %c1073741824_i32 = arith.constant 1073741824 : i32
    %18 = vector.broadcast %c1073741824_i32 : i32 to vector<1024x128xi32>
    %19 = arith.select %17, %9, %18 : vector<1024x128xi1>, vector<1024x128xi32>
    %cst_6 = arith.constant dense<2147483647> : vector<128xi32>
    %20 = vector.multi_reduction <minsi>, %19, %cst_6 [0] : vector<1024x128xi32> to vector<128xi32>
    %21 = vector.shape_cast %20 : vector<128xi32> to vector<1x128xi32>
    %c0_7 = arith.constant 0 : index
    %c0_8 = arith.constant 0 : index
    %22 = vector.load %arg6[%c0_7, %c0_8] : memref<1x128xf32, #tpu.memory_space<vmem>>, vector<1x128xf32>
    %23 = arith.cmpf ogt, %15, %22 : vector<1x128xf32>
    %c0_9 = arith.constant 0 : index
    %c0_10 = arith.constant 0 : index
    %24 = vector.load %arg7[%c0_9, %c0_10] : memref<1x128xi32, #tpu.memory_space<vmem>>, vector<1x128xi32>
    %25 = arith.select %23, %21, %24 : vector<1x128xi1>, vector<1x128xi32>
    %c0_11 = arith.constant 0 : index
    %c0_12 = arith.constant 0 : index
    %26 = vector.load %arg7[%c0_11, %c0_12] : memref<1x128xi32, #tpu.memory_space<vmem>>, vector<1x128xi32>
    tpu.vector_store %arg7[%c0_11, %c0_12], %25 {strides = array<i32>} : memref<1x128xi32, #tpu.memory_space<vmem>>, vector<1x128xi32>,
    %c0_13 = arith.constant 0 : index
    %c0_14 = arith.constant 0 : index
    %27 = vector.load %arg6[%c0_13, %c0_14] : memref<1x128xf32, #tpu.memory_space<vmem>>, vector<1x128xf32>
    %28 = arith.select %23, %15, %27 : vector<1x128xi1>, vector<1x128xf32>
    %c0_15 = arith.constant 0 : index
    %c0_16 = arith.constant 0 : index
    %29 = vector.load %arg6[%c0_15, %c0_16] : memref<1x128xf32, #tpu.memory_space<vmem>>, vector<1x128xf32>
    tpu.vector_store %arg6[%c0_15, %c0_16], %28 {strides = array<i32>} : memref<1x128xf32, #tpu.memory_space<vmem>>, vector<1x128xf32>,
    %c1_i32 = arith.constant 1 : i32
    %30 = arith.cmpi eq, %arg1, %c1_i32 : i32
    %31 = arith.extui %30 : i1 to i32
    %c0_i32_17 = arith.constant 0 : i32
    %32 = arith.cmpi ne, %31, %c0_i32_17 : i32
    scf.if %32 {
      %c0_18 = arith.constant 0 : index
      %c0_19 = arith.constant 0 : index
      %33 = vector.load %arg7[%c0_18, %c0_19] : memref<1x128xi32, #tpu.memory_space<vmem>>, vector<1x128xi32>
      %c0_20 = arith.constant 0 : index
      %c0_21 = arith.constant 0 : index
      %34 = vector.load %arg4[%c0_20, %c0_21] : memref<1x128xi32, #tpu.memory_space<vmem>>, vector<1x128xi32>
      tpu.vector_store %arg4[%c0_20, %c0_21], %33 {strides = array<i32>} : memref<1x128xi32, #tpu.memory_space<vmem>>, vector<1x128xi32>,
      %c0_22 = arith.constant 0 : index
      %c0_23 = arith.constant 0 : index
      %35 = vector.load %arg6[%c0_22, %c0_23] : memref<1x128xf32, #tpu.memory_space<vmem>>, vector<1x128xf32>
      %c0_24 = arith.constant 0 : index
      %c0_25 = arith.constant 0 : index
      %36 = vector.load %arg5[%c0_24, %c0_25] : memref<1x128xf32, #tpu.memory_space<vmem>>, vector<1x128xf32>
      tpu.vector_store %arg5[%c0_24, %c0_25], %35 {strides = array<i32>} : memref<1x128xf32, #tpu.memory_space<vmem>>, vector<1x128xf32>,
    } else {
    }
    return
  }
  func.func @transform_0(%arg0: i32, %arg1: i32) -> (i32, i32) {
    %c0_i32 = arith.constant 0 : i32
    %c0_i32_0 = arith.constant 0 : i32
    return %c0_i32, %arg0 : i32, i32
  }
  func.func @transform_1(%arg0: i32, %arg1: i32) -> (i32, i32) {
    %c0_i32 = arith.constant 0 : i32
    %c0_i32_0 = arith.constant 0 : i32
    return %arg1, %c0_i32 : i32, i32
  }
  func.func @transform_2(%arg0: i32, %arg1: i32) -> (i32, i32) {
    %c0_i32 = arith.constant 0 : i32
    %c0_i32_0 = arith.constant 0 : i32
    return %c0_i32, %arg0 : i32, i32
  }
  func.func @transform_3(%arg0: i32, %arg1: i32) -> (i32, i32) {
    %c0_i32 = arith.constant 0 : i32
    %c0_i32_0 = arith.constant 0 : i32
    return %c0_i32, %arg0 : i32, i32
  }
}

</mosaic_0001>

<llo_original>
// kernel: squeeze.2
$region0: #{squeeze.2}
  %s0 = inlined_call_operand.vmem [shape: s32[16], index: 0, kind: input, shape index: {}]
  %s1 = inlined_call_operand.hbm [shape: s32[2,8], index: 1, kind: output, shape index: {}]
  $region1: #{squeeze.2} parent=0
    #allocation0 [shape = 'u8[1024]{0}', space=vmem, size = 0x400, scoped, tag = 'operand span for operand 1']
    #allocation1 [shape = 's32[1]{0}', space=sflag, size = 0x4, scoped, tag = 'scoped memory for squeeze.2']
    #allocation2 [shape = 'u8[4096]{0}', space=vmem, size = 0x1000, scoped, tag = 'scoped mem for output reshape']
    #allocation3 [shape = 'u8[4096]{0}', space=vmem, size = 0x1000, scoped, tag = 'scoped mem for input reshape']
    %2 = vsyncpa [#allocation1], 0
    %s4 = sshllo.u32 0, 1
    %v5 = vld [vmem:[%s0] sm:%s4]
    %6 = vst [vmem:[#allocation3] sm:%s4] %v5
    %v7 = vld [vmem:[#allocation3] sm:$0x1]
    %vm8 = vcmask 64512
    %9 = vst.msk [vmem:[#allocation2] sm:$0x1] %vm8, %v7
    %v10 = vld [vmem:[#allocation3] sm:$0x1]
    %11 = vrot.lane.b32.xlu0 %v10, 120
    %v12 = vpop.permute.xlu0 %11
    %vm13 = vcmask 64512
    %s14 = scalar_lea.vmem [#allocation2], 1
    %15 = vst.msk [vmem:[%s14] sm:$0x1] %vm13, %v12
    %s17 = sshllo.u32 0, 2
    %v19 = vld [vmem:[#allocation2] sm:%s17]
    %s20 = sshllo.u32 0, 2
    %21 = vst [vmem:[#allocation0] sm:%s20] %v19
    %s23 = ssub.s32 32, 32
    %24 = vsyncadd [#allocation1], %s23
    %s26 = sshll.u32 [#allocation0], 4
    %s27 = int_to_ptr.vmem [resolvable:$true] %s26
    %29 = dma.vmem_to_hbm [thread:$0]  %s27, 32, %s1, [#allocation1]
    %30 = dma.done [#allocation1], 32
    %31 = vsyncpa [#allocation1], 1

// kernel: squeeze.3
$region0: #{squeeze.3}
  %s0 = inlined_call_operand.vmem [shape: f32[16], index: 0, kind: input, shape index: {}]
  %s1 = inlined_call_operand.hbm [shape: f32[2,8], index: 1, kind: output, shape index: {}]
  $region1: #{squeeze.3} parent=0
    #allocation0 [shape = 'u8[1024]{0}', space=vmem, size = 0x400, scoped, tag = 'operand span for operand 1']
    #allocation1 [shape = 's32[1]{0}', space=sflag, size = 0x4, scoped, tag = 'scoped memory for squeeze.3']
    #allocation2 [shape = 'u8[4096]{0}', space=vmem, size = 0x1000, scoped, tag = 'scoped mem for output reshape']
    #allocation3 [shape = 'u8[4096]{0}', space=vmem, size = 0x1000, scoped, tag = 'scoped mem for input reshape']
    %2 = vsyncpa [#allocation1], 0
    %s4 = sshllo.u32 0, 1
    %v5 = vld [vmem:[%s0] sm:%s4]
    %6 = vst [vmem:[#allocation3] sm:%s4] %v5
    %v7 = vld [vmem:[#allocation3] sm:$0x1]
    %vm8 = vcmask 64512
    %9 = vst.msk [vmem:[#allocation2] sm:$0x1] %vm8, %v7
    %v10 = vld [vmem:[#allocation3] sm:$0x1]
    %11 = vrot.lane.b32.xlu0 %v10, 120
    %v12 = vpop.permute.xlu0 %11
    %vm13 = vcmask 64512
    %s14 = scalar_lea.vmem [#allocation2], 1
    %15 = vst.msk [vmem:[%s14] sm:$0x1] %vm13, %v12
    %s17 = sshllo.u32 0, 2
    %v19 = vld [vmem:[#allocation2] sm:%s17]
    %s20 = sshllo.u32 0, 2
    %21 = vst [vmem:[#allocation0] sm:%s20] %v19
    %s23 = ssub.s32 32, 32
    %24 = vsyncadd [#allocation1], %s23
    %s26 = sshll.u32 [#allocation0], 4
    %s27 = int_to_ptr.vmem [resolvable:$true] %s26
    %29 = dma.vmem_to_hbm [thread:$0]  %s27, 32, %s1, [#allocation1]
    %30 = dma.done [#allocation1], 32
    %31 = vsyncpa [#allocation1], 1

// kernel: _greedy_decode.1
$region0: #{_greedy_decode.1}
  #allocation0 [shape = 'u32[]', space=smem, size = 0x4, offset = 0x4, fixed_abs, tag = 'smem constant byte address 0x4 - core index']
  #allocation1 [shape = 'u32[144,128]{1,0:T(1,128)}', space=vmem, size = 0x12000, scoped, tag = 'internal scratch']
  #allocation2 [shape = 'f32[1,128]{1,0:T(1,128)}', space=vmem, size = 0x200, scoped, tag = 'scratch operand']
  #allocation3 [shape = 's32[1,128]{1,0:T(1,128)}', space=vmem, size = 0x200, scoped, tag = 'scratch operand']
  %s0 = inlined_call_operand.vmem [shape: bf16[32,128], index: 0, kind: input, shape index: {}]
  %s1 = inlined_call_operand.vmem [shape: bf16[2048,32], index: 1, kind: input, shape index: {}]
  %s2 = inlined_call_operand.vmem [shape: s32[1,128], index: 2, kind: output, shape index: {0}]
  %s3 = inlined_call_operand.vmem [shape: f32[1,128], index: 3, kind: output, shape index: {1}]
  %4 = xla_tuple %s2, %s3
  %s5 = sld [smem:[#allocation0]]
  $region57: #{_greedy_decode.1} parent=0
    _
  %s7 = ssub.s32 1, %s5
  %s8 = scalar_select 0, %s7, %s5
  loop: start=0, step=1, limit=4
  $region2: #{_greedy_decode.1} parent=0 // loop_pre_header
    _
  $region3: #{_greedy_decode.1} parent=0 // loop_header
    %s10 = sphi 0, %s14
    %p11 = scmp.ge.s32.totalorder %s10, 4
    %s17 = sphi 0, %s29
    %s18 = sphi 0, %s25
    %s19 = sphi 0, %s17
    %s20 = sphi 0, %s18
    %s21 = sphi 0, %s19
    %s22 = sphi 0, %s20
    %s32 = sphi 0, %s34
    %s35 = sphi 0, %s32
    %s36 = sphi 0, %s35
    %s52 = sphi 0, %s36
    %s58 = sphi 0, %s60
    %s61 = sphi 0, %s58
    %s62 = sphi 0, %s61
    %s78 = sphi 0, %s62
    %s84 = sphi 0, %s86
    %s87 = sphi 0, %s84
    %s88 = sphi 0, %s87
    %s104 = sphi 0, %s88
    %s110 = sphi 0, %s112
    %s113 = sphi 0, %s110
    %s114 = sphi 0, %s113
    %s130 = sphi 0, %s114
  $region4: #{_greedy_decode.1} parent=0 // loop_header_branch
    %13 = sbr.rel (%p11) target = $region8
  $region5: #{_greedy_decode.1} parent=0 // loop_body
    %s15 = ssub.s32 %s10, 1
    %s16 = ssub.s32 %s10, 2
    %s23 = sadd.s32 1, %s18
    %p24 = scmp.ge.s32.totalorder %s23, 2
    %s25 = scalar_select %p24, 0, %s23
    %s26 = sadd.s32 1, %s17
    %s27 = scalar_select %p24, %s26, %s17
    %p28 = scmp.ge.s32.totalorder %s27, 1
    %s29 = scalar_select %p28, 0, %s27
    %s30 = ssub.s32 %s17, %s29
    %p31 = scmp.eq.s32.totalorder %s30, 0
    %s33 = sadd.s32 %s32, 1
    %s34 = scalar_select %p31, %s32, %s33
    %p37 = pneg %p31
    %p38 = scmp.eq.s32.totalorder %s10, 1
    %p39 = por %p37, %p38
    %p40 = scmp.ne.s32.totalorder %s32, %s35
    %p41 = scmp.eq.s32.totalorder %s10, 0
    %p42 = por %p40, %p41
    %p43 = scmp.ne.s32.totalorder %s32, %s35
    %p44 = scmp.eq.s32.totalorder %s15, 1
    %p45 = por %p43, %p44
    %p46 = scmp.ne.s32.totalorder %s35, %s36
    %p47 = scmp.eq.s32.totalorder %s15, 0
    %p48 = por %p46, %p47
    %p49 = scmp.ne.s32.totalorder %s35, %s36
    %p50 = scmp.eq.s32.totalorder %s16, 1
    %p51 = por %p49, %p50
    %p53 = scmp.ne.s32.totalorder %s36, %s52
    %p54 = scmp.eq.s32.totalorder %s16, 0
    %p55 = por %p53, %p54
    %s56 = ssub.s32 %s18, %s25
    %p57 = scmp.eq.s32.totalorder %s56, 0
    %s59 = sadd.s32 %s58, 1
    %s60 = scalar_select %p57, %s58, %s59
    %p63 = pneg %p57
    %p64 = scmp.eq.s32.totalorder %s10, 1
    %p65 = por %p63, %p64
    %p66 = scmp.ne.s32.totalorder %s58, %s61
    %p67 = scmp.eq.s32.totalorder %s10, 0
    %p68 = por %p66, %p67
    %p69 = scmp.ne.s32.totalorder %s58, %s61
    %p70 = scmp.eq.s32.totalorder %s15, 1
    %p71 = por %p69, %p70
    %p72 = scmp.ne.s32.totalorder %s61, %s62
    %p73 = scmp.eq.s32.totalorder %s15, 0
    %p74 = por %p72, %p73
    %p75 = scmp.ne.s32.totalorder %s61, %s62
    %p76 = scmp.eq.s32.totalorder %s16, 1
    %p77 = por %p75, %p76
    %p79 = scmp.ne.s32.totalorder %s62, %s78
    %p80 = scmp.eq.s32.totalorder %s16, 0
    %p81 = por %p79, %p80
    %s82 = ssub.s32 %s17, %s29
    %p83 = scmp.eq.s32.totalorder %s82, 0
    %s85 = sadd.s32 %s84, 1
    %s86 = scalar_select %p83, %s84, %s85
    %p89 = pneg %p83
    %p90 = scmp.eq.s32.totalorder %s10, 1
    %p91 = por %p89, %p90
    %p92 = scmp.ne.s32.totalorder %s84, %s87
    %p93 = scmp.eq.s32.totalorder %s10, 0
    %p94 = por %p92, %p93
    %p95 = scmp.ne.s32.totalorder %s84, %s87
    %p96 = scmp.eq.s32.totalorder %s15, 1
    %p97 = por %p95, %p96
    %p98 = scmp.ne.s32.totalorder %s87, %s88
    %p99 = scmp.eq.s32.totalorder %s15, 0
    %p100 = por %p98, %p99
    %p101 = scmp.ne.s32.totalorder %s87, %s88
    %p102 = scmp.eq.s32.totalorder %s16, 1
    %p103 = por %p101, %p102
    %p105 = scmp.ne.s32.totalorder %s88, %s104
    %p106 = scmp.eq.s32.totalorder %s16, 0
    %p107 = por %p105, %p106
    %s108 = ssub.s32 %s17, %s29
    %p109 = scmp.eq.s32.totalorder %s108, 0
    %s111 = sadd.s32 %s110, 1
    %s112 = scalar_select %p109, %s110, %s111
    %p115 = pneg %p109
    %p116 = scmp.eq.s32.totalorder %s10, 1
    %p117 = por %p115, %p116
    %p118 = scmp.ne.s32.totalorder %s110, %s113
    %p119 = scmp.eq.s32.totalorder %s10, 0
    %p120 = por %p118, %p119
    %p121 = scmp.ne.s32.totalorder %s110, %s113
    %p122 = scmp.eq.s32.totalorder %s15, 1
    %p123 = por %p121, %p122
    %p124 = scmp.ne.s32.totalorder %s113, %s114
    %p125 = scmp.eq.s32.totalorder %s15, 0
    %p126 = por %p124, %p125
    %p127 = scmp.ne.s32.totalorder %s113, %s114
    %p128 = scmp.eq.s32.totalorder %s16, 1
    %p129 = por %p127, %p128
    %p131 = scmp.ne.s32.totalorder %s114, %s130
    %p132 = scmp.eq.s32.totalorder %s16, 0
    %p133 = por %p131, %p132
    %p134 = scmp.le.s32.totalorder 1, %s10
    %p135 = scmp.lt.s32.totalorder %s10, 3
    %p136 = pnand %p134, %p135
    %p137 = pneg %p136
    // Predicated region
    $region9: #{_greedy_decode.1} parent=5 // pred_check
      _
    $region10: #{_greedy_decode.1} parent=5 // pred_check_branch
      %139 = sbr.rel (%p136) target = $region12
    $region11: #{_greedy_decode.1} parent=5 // pred_region
      %s140 = ssub.s32 %s10, 1
      // Predicated region
      $region13: #{_greedy_decode.1} parent=11 // pred_check
        %p141 = pneg %p48
      $region14: #{_greedy_decode.1} parent=11 // pred_check_branch
        %143 = sbr.rel (%p141) target = $region16
      $region15: #{_greedy_decode.1} parent=11 // pred_region
        %p144 = scmp.lt.s32.totalorder %s19, 0
        %s145 = scalar_select %p144, %s19, 0
        %s146 = smul.addr %s145, 4
        %s147 = scalar_lea.vmem %s0, %s146
      $region16: #{_greedy_decode.1} parent=11 // pred_fallthru
        _
    $region12: #{_greedy_decode.1} parent=5 // pred_fallthru
      _
    %p148 = scmp.lt.s32.totalorder %s10, 2
    // Predicated region
    $region17: #{_greedy_decode.1} parent=5 // pred_check
      %p149 = pneg %p148
    $region18: #{_greedy_decode.1} parent=5 // pred_check_branch
      %151 = sbr.rel (%p149) target = $region20
    $region19: #{_greedy_decode.1} parent=5 // pred_region
      // Predicated region
      $region21: #{_greedy_decode.1} parent=19 // pred_check
        %p152 = pneg %p68
      $region22: #{_greedy_decode.1} parent=19 // pred_check_branch
        %154 = sbr.rel (%p152) target = $region24
      $region23: #{_greedy_decode.1} parent=19 // pred_region
        %s155 = smul.u32 128, %s18
        %p156 = scmp.lt.s32.totalorder %s155, 255
        %s157 = scalar_select %p156, %s155, 255
        %s158 = smul.addr %s157, 4
        %s159 = scalar_lea.vmem %s1, %s158
        %s160 = smul.u32 128, %s18
      $region24: #{_greedy_decode.1} parent=19 // pred_fallthru
        _
    $region20: #{_greedy_decode.1} parent=5 // pred_fallthru
      _
    %p161 = scmp.le.s32.totalorder 1, %s10
    %p162 = scmp.lt.s32.totalorder %s10, 3
    %p163 = pnand %p161, %p162
    %p164 = pneg %p163
    // Predicated region
    $region25: #{_greedy_decode.1} parent=5 // pred_check
      _
    $region26: #{_greedy_decode.1} parent=5 // pred_check_branch
      %166 = sbr.rel (%p163) target = $region28
    $region27: #{_greedy_decode.1} parent=5 // pred_region
      %s167 = ssub.s32 %s10, 1
      %p168 = scmp.lt.s32.totalorder %s19, 0
      %s169 = scalar_select %p168, %s19, 0
      %s170 = smul.addr %s169, 4
      %s171 = scalar_lea.vmem %s0, %s170
      %p172 = pneg %p48
      %p173 = pneg %p45
      %s174 = smul.u32 128, %s20
      %p175 = scmp.lt.s32.totalorder %s174, 255
      %s176 = scalar_select %p175, %s174, 255
      %s177 = smul.addr %s176, 4
      %s178 = scalar_lea.vmem %s1, %s177
      %p179 = pneg %p74
      %p180 = pneg %p71
      %p181 = pneg %p100
      %p182 = pneg %p97
      %p183 = scmp.lt.s32.totalorder %s19, 0
      %s184 = scalar_select %p183, %s19, 0
      %s185 = scalar_lea.vmem %s2, %s184
      %p186 = pneg %p126
      %p187 = pneg %p123
      %p188 = scmp.lt.s32.totalorder %s19, 0
      %s189 = scalar_select %p188, %s19, 0
      %s190 = scalar_lea.vmem %s3, %s189
      %p191 = scmp.lt.s32.totalorder %s19, 0
      %s192 = scalar_select %p191, %s19, 0
      %s193 = smul.addr %s192, 4
      %s194 = scalar_lea.vmem %s0, %s193
      %s195 = smul.u32 128, %s20
      %p196 = scmp.lt.s32.totalorder %s195, 255
      %s197 = scalar_select %p196, %s195, 255
      %s198 = smul.addr %s197, 4
      %s199 = scalar_lea.vmem %s1, %s198
      %s200 = smul.u32 128, %s20
      %p201 = scmp.lt.s32.totalorder %s19, 0
      %s202 = scalar_select %p201, %s19, 0
      %s203 = scalar_lea.vmem %s2, %s202
      %p204 = scmp.lt.s32.totalorder %s19, 0
      %s205 = scalar_select %p204, %s19, 0
      %s206 = scalar_lea.vmem %s3, %s205
      %p208 = scmp.eq.s32.totalorder %s20, 0
      // Predicated region
      $region29: #{_greedy_decode.1} parent=27 // pred_check
        %p209 = pneg %p208
      $region30: #{_greedy_decode.1} parent=27 // pred_check_branch
        %211 = sbr.rel (%p209) target = $region32
      $region31: #{_greedy_decode.1} parent=27 // pred_region
        %212 = vst [vmem:[#allocation2] sm:$0x1] -inf
        %213 = vst [vmem:[#allocation3] sm:$0x1] 0
      $region32: #{_greedy_decode.1} parent=27 // pred_fallthru
        _
      %v214 = vld [vmem:[%s199] sm:$0xf]
      %v215 = vld [vmem:[%s199 + $0x4] sm:$0xf]
      %v216 = vld [vmem:[%s199 + $0x8] sm:$0xf]
      %v217 = vld [vmem:[%s199 + $0xc] sm:$0xf]
      %v218 = vld [vmem:[%s199 + $0x10] sm:$0xf]
      %v219 = vld [vmem:[%s199 + $0x14] sm:$0xf]
      %v220 = vld [vmem:[%s199 + $0x18] sm:$0xf]
      %v221 = vld [vmem:[%s199 + $0x1c] sm:$0xf]
      %v222 = vld [vmem:[%s199 + $0x20] sm:$0xf]
      %v223 = vld [vmem:[%s199 + $0x24] sm:$0xf]
      %v224 = vld [vmem:[%s199 + $0x28] sm:$0xf]
      %v225 = vld [vmem:[%s199 + $0x2c] sm:$0xf]
      %v226 = vld [vmem:[%s199 + $0x30] sm:$0xf]
      %v227 = vld [vmem:[%s199 + $0x34] sm:$0xf]
      %v228 = vld [vmem:[%s199 + $0x38] sm:$0xf]
      %v229 = vld [vmem:[%s199 + $0x3c] sm:$0xf]
      %v230 = vld [vmem:[%s199 + $0x40] sm:$0xf]
      %v231 = vld [vmem:[%s199 + $0x44] sm:$0xf]
      %v232 = vld [vmem:[%s199 + $0x48] sm:$0xf]
      %v233 = vld [vmem:[%s199 + $0x4c] sm:$0xf]
      %v234 = vld [vmem:[%s199 + $0x50] sm:$0xf]
      %v235 = vld [vmem:[%s199 + $0x54] sm:$0xf]
      %v236 = vld [vmem:[%s199 + $0x58] sm:$0xf]
      %v237 = vld [vmem:[%s199 + $0x5c] sm:$0xf]
      %v238 = vld [vmem:[%s199 + $0x60] sm:$0xf]
      %v239 = vld [vmem:[%s199 + $0x64] sm:$0xf]
      %v240 = vld [vmem:[%s199 + $0x68] sm:$0xf]
      %v241 = vld [vmem:[%s199 + $0x6c] sm:$0xf]
      %v242 = vld [vmem:[%s199 + $0x70] sm:$0xf]
      %v243 = vld [vmem:[%s199 + $0x74] sm:$0xf]
      %v244 = vld [vmem:[%s199 + $0x78] sm:$0xf]
      %v245 = vld [vmem:[%s199 + $0x7c] sm:$0xf]
      %v246 = vld [vmem:[%s199 + $0x80] sm:$0xf]
      %v247 = vld [vmem:[%s199 + $0x84] sm:$0xf]
      %v248 = vld [vmem:[%s199 + $0x88] sm:$0xf]
      %v249 = vld [vmem:[%s199 + $0x8c] sm:$0xf]
      %v250 = vld [vmem:[%s199 + $0x90] sm:$0xf]
      %v251 = vld [vmem:[%s199 + $0x94] sm:$0xf]
      %v252 = vld [vmem:[%s199 + $0x98] sm:$0xf]
      %v253 = vld [vmem:[%s199 + $0x9c] sm:$0xf]
      %v254 = vld [vmem:[%s199 + $0xa0] sm:$0xf]
      %v255 = vld [vmem:[%s199 + $0xa4] sm:$0xf]
      %v256 = vld [vmem:[%s199 + $0xa8] sm:$0xf]
      %v257 = vld [vmem:[%s199 + $0xac] sm:$0xf]
      %v258 = vld [vmem:[%s199 + $0xb0] sm:$0xf]
      %v259 = vld [vmem:[%s199 + $0xb4] sm:$0xf]
      %v260 = vld [vmem:[%s199 + $0xb8] sm:$0xf]
      %v261 = vld [vmem:[%s199 + $0xbc] sm:$0xf]
      %v262 = vld [vmem:[%s199 + $0xc0] sm:$0xf]
      %v263 = vld [vmem:[%s199 + $0xc4] sm:$0xf]
      %v264 = vld [vmem:[%s199 + $0xc8] sm:$0xf]
      %v265 = vld [vmem:[%s199 + $0xcc] sm:$0xf]
      %v266 = vld [vmem:[%s199 + $0xd0] sm:$0xf]
      %v267 = vld [vmem:[%s199 + $0xd4] sm:$0xf]
      %v268 = vld [vmem:[%s199 + $0xd8] sm:$0xf]
      %v269 = vld [vmem:[%s199 + $0xdc] sm:$0xf]
      %v270 = vld [vmem:[%s199 + $0xe0] sm:$0xf]
      %v271 = vld [vmem:[%s199 + $0xe4] sm:$0xf]
      %v272 = vld [vmem:[%s199 + $0xe8] sm:$0xf]
      %v273 = vld [vmem:[%s199 + $0xec] sm:$0xf]
      %v274 = vld [vmem:[%s199 + $0xf0] sm:$0xf]
      %v275 = vld [vmem:[%s199 + $0xf4] sm:$0xf]
      %v276 = vld [vmem:[%s199 + $0xf8] sm:$0xf]
      %v277 = vld [vmem:[%s199 + $0xfc] sm:$0xf]
      %v278 = vld [vmem:[%s199 + $0x100] sm:$0xf]
      %v279 = vld [vmem:[%s199 + $0x104] sm:$0xf]
      %v280 = vld [vmem:[%s199 + $0x108] sm:$0xf]
      %v281 = vld [vmem:[%s199 + $0x10c] sm:$0xf]
      %v282 = vld [vmem:[%s199 + $0x110] sm:$0xf]
      %v283 = vld [vmem:[%s199 + $0x114] sm:$0xf]
      %v284 = vld [vmem:[%s199 + $0x118] sm:$0xf]
      %v285 = vld [vmem:[%s199 + $0x11c] sm:$0xf]
      %v286 = vld [vmem:[%s199 + $0x120] sm:$0xf]
      %v287 = vld [vmem:[%s199 + $0x124] sm:$0xf]
      %v288 = vld [vmem:[%s199 + $0x128] sm:$0xf]
      %v289 = vld [vmem:[%s199 + $0x12c] sm:$0xf]
      %v290 = vld [vmem:[%s199 + $0x130] sm:$0xf]
      %v291 = vld [vmem:[%s199 + $0x134] sm:$0xf]
      %v292 = vld [vmem:[%s199 + $0x138] sm:$0xf]
      %v293 = vld [vmem:[%s199 + $0x13c] sm:$0xf]
      %v294 = vld [vmem:[%s199 + $0x140] sm:$0xf]
      %v295 = vld [vmem:[%s199 + $0x144] sm:$0xf]
      %v296 = vld [vmem:[%s199 + $0x148] sm:$0xf]
      %v297 = vld [vmem:[%s199 + $0x14c] sm:$0xf]
      %v298 = vld [vmem:[%s199 + $0x150] sm:$0xf]
      %v299 = vld [vmem:[%s199 + $0x154] sm:$0xf]
      %v300 = vld [vmem:[%s199 + $0x158] sm:$0xf]
      %v301 = vld [vmem:[%s199 + $0x15c] sm:$0xf]
      %v302 = vld [vmem:[%s199 + $0x160] sm:$0xf]
      %v303 = vld [vmem:[%s199 + $0x164] sm:$0xf]
      %v304 = vld [vmem:[%s199 + $0x168] sm:$0xf]
      %v305 = vld [vmem:[%s199 + $0x16c] sm:$0xf]
      %v306 = vld [vmem:[%s199 + $0x170] sm:$0xf]
      %v307 = vld [vmem:[%s199 + $0x174] sm:$0xf]
      %v308 = vld [vmem:[%s199 + $0x178] sm:$0xf]
      %v309 = vld [vmem:[%s199 + $0x17c] sm:$0xf]
      %v310 = vld [vmem:[%s199 + $0x180] sm:$0xf]
      %v311 = vld [vmem:[%s199 + $0x184] sm:$0xf]
      %v312 = vld [vmem:[%s199 + $0x188] sm:$0xf]
      %v313 = vld [vmem:[%s199 + $0x18c] sm:$0xf]
      %v314 = vld [vmem:[%s199 + $0x190] sm:$0xf]
      %v315 = vld [vmem:[%s199 + $0x194] sm:$0xf]
      %v316 = vld [vmem:[%s199 + $0x198] sm:$0xf]
      %v317 = vld [vmem:[%s199 + $0x19c] sm:$0xf]
      %v318 = vld [vmem:[%s199 + $0x1a0] sm:$0xf]
      %v319 = vld [vmem:[%s199 + $0x1a4] sm:$0xf]
      %v320 = vld [vmem:[%s199 + $0x1a8] sm:$0xf]
      %v321 = vld [vmem:[%s199 + $0x1ac] sm:$0xf]
      %v322 = vld [vmem:[%s199 + $0x1b0] sm:$0xf]
      %v323 = vld [vmem:[%s199 + $0x1b4] sm:$0xf]
      %v324 = vld [vmem:[%s199 + $0x1b8] sm:$0xf]
      %v325 = vld [vmem:[%s199 + $0x1bc] sm:$0xf]
      %v326 = vld [vmem:[%s199 + $0x1c0] sm:$0xf]
      %v327 = vld [vmem:[%s199 + $0x1c4] sm:$0xf]
      %v328 = vld [vmem:[%s199 + $0x1c8] sm:$0xf]
      %v329 = vld [vmem:[%s199 + $0x1cc] sm:$0xf]
      %v330 = vld [vmem:[%s199 + $0x1d0] sm:$0xf]
      %v331 = vld [vmem:[%s199 + $0x1d4] sm:$0xf]
      %v332 = vld [vmem:[%s199 + $0x1d8] sm:$0xf]
      %v333 = vld [vmem:[%s199 + $0x1dc] sm:$0xf]
      %v334 = vld [vmem:[%s199 + $0x1e0] sm:$0xf]
      %v335 = vld [vmem:[%s199 + $0x1e4] sm:$0xf]
      %v336 = vld [vmem:[%s199 + $0x1e8] sm:$0xf]
      %v337 = vld [vmem:[%s199 + $0x1ec] sm:$0xf]
      %v338 = vld [vmem:[%s199 + $0x1f0] sm:$0xf]
      %v339 = vld [vmem:[%s199 + $0x1f4] sm:$0xf]
      %v340 = vld [vmem:[%s199 + $0x1f8] sm:$0xf]
      %v341 = vld [vmem:[%s199 + $0x1fc] sm:$0xf]
      %v342 = vld [vmem:[%s194] sm:$0xf]
      %v343 = vld [vmem:[%s194 + $0x4] sm:$0xf]
      %v344 = vld [vmem:[%s194 + $0x8] sm:$0xf]
      %v345 = vld [vmem:[%s194 + $0xc] sm:$0xf]
      %v474 = vunpack.c.l.b16 %v214
      %v475 = vunpack.c.l.b16 %v215
      %v476 = vunpack.c.l.b16 %v216
      %v477 = vunpack.c.l.b16 %v217
      %v478 = vunpack.c.l.b16 %v218
      %v479 = vunpack.c.l.b16 %v219
      %v480 = vunpack.c.l.b16 %v220
      %v481 = vunpack.c.l.b16 %v221
      %v482 = vunpack.c.l.b16 %v222
      %v483 = vunpack.c.l.b16 %v223
      %v484 = vunpack.c.l.b16 %v224
      %v485 = vunpack.c.l.b16 %v225
      %v486 = vunpack.c.l.b16 %v226
      %v487 = vunpack.c.l.b16 %v227
      %v488 = vunpack.c.l.b16 %v228
      %v489 = vunpack.c.l.b16 %v229
      %v490 = vunpack.c.l.b16 %v230
      %v491 = vunpack.c.l.b16 %v231
      %v492 = vunpack.c.l.b16 %v232
      %v493 = vunpack.c.l.b16 %v233
      %v494 = vunpack.c.l.b16 %v234
      %v495 = vunpack.c.l.b16 %v235
      %v496 = vunpack.c.l.b16 %v236
      %v497 = vunpack.c.l.b16 %v237
      %v498 = vunpack.c.l.b16 %v238
      %v499 = vunpack.c.l.b16 %v239
      %v500 = vunpack.c.l.b16 %v240
      %v501 = vunpack.c.l.b16 %v241
      %v502 = vunpack.c.l.b16 %v242
      %v503 = vunpack.c.l.b16 %v243
      %v504 = vunpack.c.l.b16 %v244
      %v505 = vunpack.c.l.b16 %v245
      %v506 = vunpack.c.l.b16 %v246
      %v507 = vunpack.c.l.b16 %v247
      %v508 = vunpack.c.l.b16 %v248
      %v509 = vunpack.c.l.b16 %v249
      %v510 = vunpack.c.l.b16 %v250
      %v511 = vunpack.c.l.b16 %v251
      %v512 = vunpack.c.l.b16 %v252
      %v513 = vunpack.c.l.b16 %v253
      %v514 = vunpack.c.l.b16 %v254
      %v515 = vunpack.c.l.b16 %v255
      %v516 = vunpack.c.l.b16 %v256
      %v517 = vunpack.c.l.b16 %v257
      %v518 = vunpack.c.l.b16 %v258
      %v519 = vunpack.c.l.b16 %v259
      %v520 = vunpack.c.l.b16 %v260
      %v521 = vunpack.c.l.b16 %v261
      %v522 = vunpack.c.l.b16 %v262
      %v523 = vunpack.c.l.b16 %v263
      %v524 = vunpack.c.l.b16 %v264
      %v525 = vunpack.c.l.b16 %v265
      %v526 = vunpack.c.l.b16 %v266
      %v527 = vunpack.c.l.b16 %v267
      %v528 = vunpack.c.l.b16 %v268
      %v529 = vunpack.c.l.b16 %v269
      %v530 = vunpack.c.l.b16 %v270
      %v531 = vunpack.c.l.b16 %v271
      %v532 = vunpack.c.l.b16 %v272
      %v533 = vunpack.c.l.b16 %v273
      %v534 = vunpack.c.l.b16 %v274
      %v535 = vunpack.c.l.b16 %v275
      %v536 = vunpack.c.l.b16 %v276
      %v537 = vunpack.c.l.b16 %v277
      %v538 = vunpack.c.l.b16 %v278
      %v539 = vunpack.c.l.b16 %v279
      %v540 = vunpack.c.l.b16 %v280
      %v541 = vunpack.c.l.b16 %v281
      %v542 = vunpack.c.l.b16 %v282
      %v543 = vunpack.c.l.b16 %v283
      %v544 = vunpack.c.l.b16 %v284
      %v545 = vunpack.c.l.b16 %v285
      %v546 = vunpack.c.l.b16 %v286
      %v547 = vunpack.c.l.b16 %v287
      %v548 = vunpack.c.l.b16 %v288
      %v549 = vunpack.c.l.b16 %v289
      %v550 = vunpack.c.l.b16 %v290
      %v551 = vunpack.c.l.b16 %v291
      %v552 = vunpack.c.l.b16 %v292
      %v553 = vunpack.c.l.b16 %v293
      %v554 = vunpack.c.l.b16 %v294
      %v555 = vunpack.c.l.b16 %v295
      %v556 = vunpack.c.l.b16 %v296
      %v557 = vunpack.c.l.b16 %v297
      %v558 = vunpack.c.l.b16 %v298
      %v559 = vunpack.c.l.b16 %v299
      %v560 = vunpack.c.l.b16 %v300
      %v561 = vunpack.c.l.b16 %v301
      %v562 = vunpack.c.l.b16 %v302
      %v563 = vunpack.c.l.b16 %v303
      %v564 = vunpack.c.l.b16 %v304
      %v565 = vunpack.c.l.b16 %v305
      %v566 = vunpack.c.l.b16 %v306
      %v567 = vunpack.c.l.b16 %v307
      %v568 = vunpack.c.l.b16 %v308
      %v569 = vunpack.c.l.b16 %v309
      %v570 = vunpack.c.l.b16 %v310
      %v571 = vunpack.c.l.b16 %v311
      %v572 = vunpack.c.l.b16 %v312
      %v573 = vunpack.c.l.b16 %v313
      %v574 = vunpack.c.l.b16 %v314
      %v575 = vunpack.c.l.b16 %v315
      %v576 = vunpack.c.l.b16 %v316
      %v577 = vunpack.c.l.b16 %v317
      %v578 = vunpack.c.l.b16 %v318
      %v579 = vunpack.c.l.b16 %v319
      %v580 = vunpack.c.l.b16 %v320
      %v581 = vunpack.c.l.b16 %v321
      %v582 = vunpack.c.l.b16 %v322
      %v583 = vunpack.c.l.b16 %v323
      %v584 = vunpack.c.l.b16 %v324
      %v585 = vunpack.c.l.b16 %v325
      %v586 = vunpack.c.l.b16 %v326
      %v587 = vunpack.c.l.b16 %v327
      %v588 = vunpack.c.l.b16 %v328
      %v589 = vunpack.c.l.b16 %v329
      %v590 = vunpack.c.l.b16 %v330
      %v591 = vunpack.c.l.b16 %v331
      %v592 = vunpack.c.l.b16 %v332
      %v593 = vunpack.c.l.b16 %v333
      %v594 = vunpack.c.l.b16 %v334
      %v595 = vunpack.c.l.b16 %v335
      %v596 = vunpack.c.l.b16 %v336
      %v597 = vunpack.c.l.b16 %v337
      %v598 = vunpack.c.l.b16 %v338
      %v599 = vunpack.c.l.b16 %v339
      %v600 = vunpack.c.l.b16 %v340
      %v601 = vunpack.c.l.b16 %v341
      %v602 = vpack.c.b16 %v475, %v474
      %v603 = vpack.c.b16 %v477, %v476
      %v604 = vpack.c.b16 %v479, %v478
      %v605 = vpack.c.b16 %v481, %v480
      %v606 = vpack.c.b16 %v483, %v482
      %v607 = vpack.c.b16 %v485, %v484
      %v608 = vpack.c.b16 %v487, %v486
      %v609 = vpack.c.b16 %v489, %v488
      %v610 = vpack.c.b16 %v491, %v490
      %v611 = vpack.c.b16 %v493, %v492
      %v612 = vpack.c.b16 %v495, %v494
      %v613 = vpack.c.b16 %v497, %v496
      %v614 = vpack.c.b16 %v499, %v498
      %v615 = vpack.c.b16 %v501, %v500
      %v616 = vpack.c.b16 %v503, %v502
      %v617 = vpack.c.b16 %v505, %v504
      %v618 = vpack.c.b16 %v507, %v506
      %v619 = vpack.c.b16 %v509, %v508
      %v620 = vpack.c.b16 %v511, %v510
      %v621 = vpack.c.b16 %v513, %v512
      %v622 = vpack.c.b16 %v515, %v514
      %v623 = vpack.c.b16 %v517, %v516
      %v624 = vpack.c.b16 %v519, %v518
      %v625 = vpack.c.b16 %v521, %v520
      %v626 = vpack.c.b16 %v523, %v522
      %v627 = vpack.c.b16 %v525, %v524
      %v628 = vpack.c.b16 %v527, %v526
      %v629 = vpack.c.b16 %v529, %v528
      %v630 = vpack.c.b16 %v531, %v530
      %v631 = vpack.c.b16 %v533, %v532
      %v632 = vpack.c.b16 %v535, %v534
      %v633 = vpack.c.b16 %v537, %v536
      %v634 = vpack.c.b16 %v539, %v538
      %v635 = vpack.c.b16 %v541, %v540
      %v636 = vpack.c.b16 %v543, %v542
      %v637 = vpack.c.b16 %v545, %v544
      %v638 = vpack.c.b16 %v547, %v546
      %v639 = vpack.c.b16 %v549, %v548
      %v640 = vpack.c.b16 %v551, %v550
      %v641 = vpack.c.b16 %v553, %v552
      %v642 = vpack.c.b16 %v555, %v554
      %v643 = vpack.c.b16 %v557, %v556
      %v644 = vpack.c.b16 %v559, %v558
      %v645 = vpack.c.b16 %v561, %v560
      %v646 = vpack.c.b16 %v563, %v562
      %v647 = vpack.c.b16 %v565, %v564
      %v648 = vpack.c.b16 %v567, %v566
      %v649 = vpack.c.b16 %v569, %v568
      %v650 = vpack.c.b16 %v571, %v570
      %v651 = vpack.c.b16 %v573, %v572
      %v652 = vpack.c.b16 %v575, %v574
      %v653 = vpack.c.b16 %v577, %v576
      %v654 = vpack.c.b16 %v579, %v578
      %v655 = vpack.c.b16 %v581, %v580
      %v656 = vpack.c.b16 %v583, %v582
      %v657 = vpack.c.b16 %v585, %v584
      %v658 = vpack.c.b16 %v587, %v586
      %v659 = vpack.c.b16 %v589, %v588
      %v660 = vpack.c.b16 %v591, %v590
      %v661 = vpack.c.b16 %v593, %v592
      %v662 = vpack.c.b16 %v595, %v594
      %v663 = vpack.c.b16 %v597, %v596
      %v664 = vpack.c.b16 %v599, %v598
      %v665 = vpack.c.b16 %v601, %v600
      %v670 = vunpack.c.l.b16 %v342
      %v671 = vunpack.c.l.b16 %v343
      %v672 = vunpack.c.l.b16 %v344
      %v673 = vunpack.c.l.b16 %v345
      %v674 = vpack.c.b16 %v671, %v670
      %v675 = vpack.c.b16 %v673, %v672
      %vm678 = vcmask 261120
      %v680 = vsel %vm678, %v602, 0
      %v683 = vsel %vm678, %v603, 0
      %v686 = vsel %vm678, %v604, 0
      %v689 = vsel %vm678, %v605, 0
      %v692 = vsel %vm678, %v606, 0
      %v695 = vsel %vm678, %v607, 0
      %v698 = vsel %vm678, %v608, 0
      %v701 = vsel %vm678, %v609, 0
      %v704 = vsel %vm678, %v610, 0
      %v707 = vsel %vm678, %v611, 0
      %v710 = vsel %vm678, %v612, 0
      %v713 = vsel %vm678, %v613, 0
      %v716 = vsel %vm678, %v614, 0
      %v719 = vsel %vm678, %v615, 0
      %v722 = vsel %vm678, %v616, 0
      %v725 = vsel %vm678, %v617, 0
      %v728 = vsel %vm678, %v618, 0
      %v731 = vsel %vm678, %v619, 0
      %v734 = vsel %vm678, %v620, 0
      %v737 = vsel %vm678, %v621, 0
      %v740 = vsel %vm678, %v622, 0
      %v743 = vsel %vm678, %v623, 0
      %v746 = vsel %vm678, %v624, 0
      %v749 = vsel %vm678, %v625, 0
      %v752 = vsel %vm678, %v626, 0
      %v755 = vsel %vm678, %v627, 0
      %v758 = vsel %vm678, %v628, 0
      %v761 = vsel %vm678, %v629, 0
      %v764 = vsel %vm678, %v630, 0
      %v767 = vsel %vm678, %v631, 0
      %v770 = vsel %vm678, %v632, 0
      %v773 = vsel %vm678, %v633, 0
      %v776 = vsel %vm678, %v634, 0
      %v779 = vsel %vm678, %v635, 0
      %v782 = vsel %vm678, %v636, 0
      %v785 = vsel %vm678, %v637, 0
      %v788 = vsel %vm678, %v638, 0
      %v791 = vsel %vm678, %v639, 0
      %v794 = vsel %vm678, %v640, 0
      %v797 = vsel %vm678, %v641, 0
      %v800 = vsel %vm678, %v642, 0
      %v803 = vsel %vm678, %v643, 0
      %v806 = vsel %vm678, %v644, 0
      %v809 = vsel %vm678, %v645, 0
      %v812 = vsel %vm678, %v646, 0
      %v815 = vsel %vm678, %v647, 0
      %v818 = vsel %vm678, %v648, 0
      %v821 = vsel %vm678, %v649, 0
      %v824 = vsel %vm678, %v650, 0
      %v827 = vsel %vm678, %v651, 0
      %v830 = vsel %vm678, %v652, 0
      %v833 = vsel %vm678, %v653, 0
      %v836 = vsel %vm678, %v654, 0
      %v839 = vsel %vm678, %v655, 0
      %v842 = vsel %vm678, %v656, 0
      %v845 = vsel %vm678, %v657, 0
      %v848 = vsel %vm678, %v658, 0
      %v851 = vsel %vm678, %v659, 0
      %v854 = vsel %vm678, %v660, 0
      %v857 = vsel %vm678, %v661, 0
      %v860 = vsel %vm678, %v662, 0
      %v863 = vsel %vm678, %v663, 0
      %v866 = vsel %vm678, %v664, 0
      %v869 = vsel %vm678, %v665, 0
      %871 = vmatprep.subr.bf16.mxu0 0
      %872 = vmatpush1.bf16.msra.mxu0 %v674
      %873 = vmatprep.subr.bf16.mxu0 0
      %874 = vmatpush1.bf16.msra.mxu0 %v675
      %875 = vmatprep.subr.bf16.mxu0 0
      %876 = vmatpush1.bf16.msra.mxu0 0
      %877 = vmatprep.subr.bf16.mxu0 0
      %878 = vmatpush1.bf16.msra.mxu0 0
      %879 = vmatprep.subr.bf16.mxu0 0
      %880 = vmatpush1.bf16.msra.mxu0 0
      %881 = vmatprep.subr.bf16.mxu0 0
      %882 = vmatpush1.bf16.msra.mxu0 0
      %883 = vmatprep.subr.bf16.mxu0 0
      %884 = vmatpush1.bf16.msra.mxu0 0
      %885 = vmatprep.subr.bf16.mxu0 0
      %886 = vmatpush1.bf16.msra.mxu0 0
      %887 = vmatprep.subr.bf16.mxu0 0
      %888 = vmatpush1.bf16.msra.mxu0 0
      %889 = vmatprep.subr.bf16.mxu0 0
      %890 = vmatpush1.bf16.msra.mxu0 0
      %891 = vmatprep.subr.bf16.mxu0 0
      %892 = vmatpush1.bf16.msra.mxu0 0
      %893 = vmatprep.subr.bf16.mxu0 0
      %894 = vmatpush1.bf16.msra.mxu0 0
      %895 = vmatprep.subr.bf16.mxu0 0
      %896 = vmatpush1.bf16.msra.mxu0 0
      %897 = vmatprep.subr.bf16.mxu0 0
      %898 = vmatpush1.bf16.msra.mxu0 0
      %899 = vmatprep.subr.bf16.mxu0 0
      %900 = vmatpush1.bf16.msra.mxu0 0
      %901 = vmatprep.subr.bf16.mxu0 0
      %902 = vmatpush1.bf16.msra.mxu0 0
      %903 = vmatprep.mubr.bf16.mxu0 0
      %904 = vmatmul.mubr.bf16.gmra.mrb[0].mxu0 %v680
      %v905 = vpop.f32.mrb[0].mxu0
      %v906 = vadd.f32 0.0, %v905
      %v907 = vpop.f32.mrb[0].mxu0
      %v908 = vpop.f32.mrb[0].mxu0
      %v909 = vadd.f32 0.0, %v908
      %v910 = vpop.f32.mrb[0].mxu0
      %911 = vmatprep.mubr.bf16.mxu0 0
      %912 = vmatmul.mubr.bf16.gmra.mrb[0].mxu0 %v683
      %v913 = vpop.f32.mrb[0].mxu0
      %v914 = vadd.f32 0.0, %v913
      %v915 = vpop.f32.mrb[0].mxu0
      %v916 = vpop.f32.mrb[0].mxu0
      %v917 = vadd.f32 0.0, %v916
      %v918 = vpop.f32.mrb[0].mxu0
      %919 = vmatprep.mubr.bf16.mxu0 0
      %920 = vmatmul.mubr.bf16.gmra.mrb[0].mxu0 %v686
      %v921 = vpop.f32.mrb[0].mxu0
      %v922 = vadd.f32 0.0, %v921
      %v923 = vpop.f32.mrb[0].mxu0
      %v924 = vpop.f32.mrb[0].mxu0
      %v925 = vadd.f32 0.0, %v924
      %v926 = vpop.f32.mrb[0].mxu0
      %927 = vmatprep.mubr.bf16.mxu0 0
      %928 = vmatmul.mubr.bf16.gmra.mrb[0].mxu0 %v689
      %v929 = vpop.f32.mrb[0].mxu0
      %v930 = vadd.f32 0.0, %v929
      %v931 = vpop.f32.mrb[0].mxu0
      %v932 = vpop.f32.mrb[0].mxu0
      %v933 = vadd.f32 0.0, %v932
      %v934 = vpop.f32.mrb[0].mxu0
      %935 = vmatprep.mubr.bf16.mxu0 0
      %936 = vmatmul.mubr.bf16.gmra.mrb[0].mxu0 %v692
      %v937 = vpop.f32.mrb[0].mxu0
      %v938 = vadd.f32 0.0, %v937
      %v939 = vpop.f32.mrb[0].mxu0
      %v940 = vpop.f32.mrb[0].mxu0
      %v941 = vadd.f32 0.0, %v940
      %v942 = vpop.f32.mrb[0].mxu0
      %943 = vmatprep.mubr.bf16.mxu0 0
      %944 = vmatmul.mubr.bf16.gmra.mrb[0].mxu0 %v695
      %v945 = vpop.f32.mrb[0].mxu0
      %v946 = vadd.f32 0.0, %v945
      %v947 = vpop.f32.mrb[0].mxu0
      %v948 = vpop.f32.mrb[0].mxu0
      %v949 = vadd.f32 0.0, %v948
      %v950 = vpop.f32.mrb[0].mxu0
      %951 = vmatprep.mubr.bf16.mxu0 0
      %952 = vmatmul.mubr.bf16.gmra.mrb[0].mxu0 %v698
      %v953 = vpop.f32.mrb[0].mxu0
      %v954 = vadd.f32 0.0, %v953
      %v955 = vpop.f32.mrb[0].mxu0
      %v956 = vpop.f32.mrb[0].mxu0
      %v957 = vadd.f32 0.0, %v956
      %v958 = vpop.f32.mrb[0].mxu0
      %959 = vmatprep.mubr.bf16.mxu0 0
      %960 = vmatmul.mubr.bf16.gmra.mrb[0].mxu0 %v701
      %v961 = vpop.f32.mrb[0].mxu0
      %v962 = vadd.f32 0.0, %v961
      %v963 = vpop.f32.mrb[0].mxu0
      %v964 = vpop.f32.mrb[0].mxu0
      %v965 = vadd.f32 0.0, %v964
      %v966 = vpop.f32.mrb[0].mxu0
      %967 = vmatprep.mubr.bf16.mxu0 0
      %968 = vmatmul.mubr.bf16.gmra.mrb[0].mxu0 %v704
      %v969 = vpop.f32.mrb[0].mxu0
      %v970 = vadd.f32 0.0, %v969
      %v971 = vpop.f32.mrb[0].mxu0
      %v972 = vpop.f32.mrb[0].mxu0
      %v973 = vadd.f32 0.0, %v972
      %v974 = vpop.f32.mrb[0].mxu0
      %975 = vmatprep.mubr.bf16.mxu0 0
      %976 = vmatmul.mubr.bf16.gmra.mrb[0].mxu0 %v707
      %v977 = vpop.f32.mrb[0].mxu0
      %v978 = vadd.f32 0.0, %v977
      %v979 = vpop.f32.mrb[0].mxu0
      %v980 = vpop.f32.mrb[0].mxu0
      %v981 = vadd.f32 0.0, %v980
      %v982 = vpop.f32.mrb[0].mxu0
      %983 = vmatprep.mubr.bf16.mxu0 0
      %984 = vmatmul.mubr.bf16.gmra.mrb[0].mxu0 %v710
      %v985 = vpop.f32.mrb[0].mxu0
      %v986 = vadd.f32 0.0, %v985
      %v987 = vpop.f32.mrb[0].mxu0
      %v988 = vpop.f32.mrb[0].mxu0
      %v989 = vadd.f32 0.0, %v988
      %v990 = vpop.f32.mrb[0].mxu0
      %991 = vmatprep.mubr.bf16.mxu0 0
      %992 = vmatmul.mubr.bf16.gmra.mrb[0].mxu0 %v713
      %v993 = vpop.f32.mrb[0].mxu0
      %v994 = vadd.f32 0.0, %v993
      %v995 = vpop.f32.mrb[0].mxu0
      %v996 = vpop.f32.mrb[0].mxu0
      %v997 = vadd.f32 0.0, %v996
      %v998 = vpop.f32.mrb[0].mxu0
      %999 = vmatprep.mubr.bf16.mxu0 0
      %1000 = vmatmul.mubr.bf16.gmra.mrb[0].mxu0 %v716
      %v1001 = vpop.f32.mrb[0].mxu0
      %v1002 = vadd.f32 0.0, %v1001
      %v1003 = vpop.f32.mrb[0].mxu0
      %v1004 = vpop.f32.mrb[0].mxu0
      %v1005 = vadd.f32 0.0, %v1004
      %v1006 = vpop.f32.mrb[0].mxu0
      %1007 = vmatprep.mubr.bf16.mxu0 0
      %1008 = vmatmul.mubr.bf16.gmra.mrb[0].mxu0 %v719
      %v1009 = vpop.f32.mrb[0].mxu0
      %v1010 = vadd.f32 0.0, %v1009
      %v1011 = vpop.f32.mrb[0].mxu0
      %v1012 = vpop.f32.mrb[0].mxu0
      %v1013 = vadd.f32 0.0, %v1012
      %v1014 = vpop.f32.mrb[0].mxu0
      %1015 = vmatprep.mubr.bf16.mxu0 0
      %1016 = vmatmul.mubr.bf16.gmra.mrb[0].mxu0 %v722
      %v1017 = vpop.f32.mrb[0].mxu0
      %v1018 = vadd.f32 0.0, %v1017
      %v1019 = vpop.f32.mrb[0].mxu0
      %v1020 = vpop.f32.mrb[0].mxu0
      %v1021 = vadd.f32 0.0, %v1020
      %v1022 = vpop.f32.mrb[0].mxu0
      %1023 = vmatprep.mubr.bf16.mxu0 0
      %1024 = vmatmul.mubr.bf16.gmra.mrb[0].mxu0 %v725
      %v1025 = vpop.f32.mrb[0].mxu0
      %v1026 = vadd.f32 0.0, %v1025
      %v1027 = vpop.f32.mrb[0].mxu0
      %v1028 = vpop.f32.mrb[0].mxu0
      %v1029 = vadd.f32 0.0, %v1028
      %v1030 = vpop.f32.mrb[0].mxu0
      %1031 = vmatprep.mubr.bf16.mxu0 0
      %1032 = vmatmul.mubr.bf16.gmra.mrb[0].mxu0 %v728
      %v1033 = vpop.f32.mrb[0].mxu0
      %v1034 = vadd.f32 0.0, %v1033
      %v1035 = vpop.f32.mrb[0].mxu0
      %v1036 = vpop.f32.mrb[0].mxu0
      %v1037 = vadd.f32 0.0, %v1036
      %v1038 = vpop.f32.mrb[0].mxu0
      %1039 = vmatprep.mubr.bf16.mxu0 0
      %1040 = vmatmul.mubr.bf16.gmra.mrb[0].mxu0 %v731
      %v1041 = vpop.f32.mrb[0].mxu0
      %v1042 = vadd.f32 0.0, %v1041
      %v1043 = vpop.f32.mrb[0].mxu0
      %v1044 = vpop.f32.mrb[0].mxu0
      %v1045 = vadd.f32 0.0, %v1044
      %v1046 = vpop.f32.mrb[0].mxu0
      %1047 = vmatprep.mubr.bf16.mxu0 0
      %1048 = vmatmul.mubr.bf16.gmra.mrb[0].mxu0 %v734
      %v1049 = vpop.f32.mrb[0].mxu0
      %v1050 = vadd.f32 0.0, %v1049
      %v1051 = vpop.f32.mrb[0].mxu0
      %v1052 = vpop.f32.mrb[0].mxu0
      %v1053 = vadd.f32 0.0, %v1052
      %v1054 = vpop.f32.mrb[0].mxu0
      %1055 = vmatprep.mubr.bf16.mxu0 0
      %1056 = vmatmul.mubr.bf16.gmra.mrb[0].mxu0 %v737
      %v1057 = vpop.f32.mrb[0].mxu0
      %v1058 = vadd.f32 0.0, %v1057
      %v1059 = vpop.f32.mrb[0].mxu0
      %v1060 = vpop.f32.mrb[0].mxu0
      %v1061 = vadd.f32 0.0, %v1060
      %v1062 = vpop.f32.mrb[0].mxu0
      %1063 = vmatprep.mubr.bf16.mxu0 0
      %1064 = vmatmul.mubr.bf16.gmra.mrb[0].mxu0 %v740
      %v1065 = vpop.f32.mrb[0].mxu0
      %v1066 = vadd.f32 0.0, %v1065
      %v1067 = vpop.f32.mrb[0].mxu0
      %v1068 = vpop.f32.mrb[0].mxu0
      %v1069 = vadd.f32 0.0, %v1068
      %v1070 = vpop.f32.mrb[0].mxu0
      %1071 = vmatprep.mubr.bf16.mxu0 0
      %1072 = vmatmul.mubr.bf16.gmra.mrb[0].mxu0 %v743
      %v1073 = vpop.f32.mrb[0].mxu0
      %v1074 = vadd.f32 0.0, %v1073
      %v1075 = vpop.f32.mrb[0].mxu0
      %v1076 = vpop.f32.mrb[0].mxu0
      %v1077 = vadd.f32 0.0, %v1076
      %v1078 = vpop.f32.mrb[0].mxu0
      %1079 = vmatprep.mubr.bf16.mxu0 0
      %1080 = vmatmul.mubr.bf16.gmra.mrb[0].mxu0 %v746
      %v1081 = vpop.f32.mrb[0].mxu0
      %v1082 = vadd.f32 0.0, %v1081
      %v1083 = vpop.f32.mrb[0].mxu0
      %v1084 = vpop.f32.mrb[0].mxu0
      %v1085 = vadd.f32 0.0, %v1084
      %v1086 = vpop.f32.mrb[0].mxu0
      %1087 = vmatprep.mubr.bf16.mxu0 0
      %1088 = vmatmul.mubr.bf16.gmra.mrb[0].mxu0 %v749
      %v1089 = vpop.f32.mrb[0].mxu0
      %v1090 = vadd.f32 0.0, %v1089
      %v1091 = vpop.f32.mrb[0].mxu0
      %v1092 = vpop.f32.mrb[0].mxu0
      %v1093 = vadd.f32 0.0, %v1092
      %v1094 = vpop.f32.mrb[0].mxu0
      %1095 = vmatprep.mubr.bf16.mxu0 0
      %1096 = vmatmul.mubr.bf16.gmra.mrb[0].mxu0 %v752
      %v1097 = vpop.f32.mrb[0].mxu0
      %v1098 = vadd.f32 0.0, %v1097
      %v1099 = vpop.f32.mrb[0].mxu0
      %v1100 = vpop.f32.mrb[0].mxu0
      %v1101 = vadd.f32 0.0, %v1100
      %v1102 = vpop.f32.mrb[0].mxu0
      %1103 = vmatprep.mubr.bf16.mxu0 0
      %1104 = vmatmul.mubr.bf16.gmra.mrb[0].mxu0 %v755
      %v1105 = vpop.f32.mrb[0].mxu0
      %v1106 = vadd.f32 0.0, %v1105
      %v1107 = vpop.f32.mrb[0].mxu0
      %v1108 = vpop.f32.mrb[0].mxu0
      %v1109 = vadd.f32 0.0, %v1108
      %v1110 = vpop.f32.mrb[0].mxu0
      %1111 = vmatprep.mubr.bf16.mxu0 0
      %1112 = vmatmul.mubr.bf16.gmra.mrb[0].mxu0 %v758
      %v1113 = vpop.f32.mrb[0].mxu0
      %v1114 = vadd.f32 0.0, %v1113
      %v1115 = vpop.f32.mrb[0].mxu0
      %v1116 = vpop.f32.mrb[0].mxu0
      %v1117 = vadd.f32 0.0, %v1116
      %v1118 = vpop.f32.mrb[0].mxu0
      %1119 = vmatprep.mubr.bf16.mxu0 0
      %1120 = vmatmul.mubr.bf16.gmra.mrb[0].mxu0 %v761
      %v1121 = vpop.f32.mrb[0].mxu0
      %v1122 = vadd.f32 0.0, %v1121
      %v1123 = vpop.f32.mrb[0].mxu0
      %v1124 = vpop.f32.mrb[0].mxu0
      %v1125 = vadd.f32 0.0, %v1124
      %v1126 = vpop.f32.mrb[0].mxu0
      %1127 = vmatprep.mubr.bf16.mxu0 0
      %1128 = vmatmul.mubr.bf16.gmra.mrb[0].mxu0 %v764
      %v1129 = vpop.f32.mrb[0].mxu0
      %v1130 = vadd.f32 0.0, %v1129
      %v1131 = vpop.f32.mrb[0].mxu0
      %v1132 = vpop.f32.mrb[0].mxu0
      %v1133 = vadd.f32 0.0, %v1132
      %v1134 = vpop.f32.mrb[0].mxu0
      %1135 = vmatprep.mubr.bf16.mxu0 0
      %1136 = vmatmul.mubr.bf16.gmra.mrb[0].mxu0 %v767
      %v1137 = vpop.f32.mrb[0].mxu0
      %v1138 = vadd.f32 0.0, %v1137
      %v1139 = vpop.f32.mrb[0].mxu0
      %v1140 = vpop.f32.mrb[0].mxu0
      %v1141 = vadd.f32 0.0, %v1140
      %v1142 = vpop.f32.mrb[0].mxu0
      %1143 = vmatprep.mubr.bf16.mxu0 0
      %1144 = vmatmul.mubr.bf16.gmra.mrb[0].mxu0 %v770
      %v1145 = vpop.f32.mrb[0].mxu0
      %v1146 = vadd.f32 0.0, %v1145
      %v1147 = vpop.f32.mrb[0].mxu0
      %v1148 = vpop.f32.mrb[0].mxu0
      %v1149 = vadd.f32 0.0, %v1148
      %v1150 = vpop.f32.mrb[0].mxu0
      %1151 = vmatprep.mubr.bf16.mxu0 0
      %1152 = vmatmul.mubr.bf16.gmra.mrb[0].mxu0 %v773
      %v1153 = vpop.f32.mrb[0].mxu0
      %v1154 = vadd.f32 0.0, %v1153
      %v1155 = vpop.f32.mrb[0].mxu0
      %v1156 = vpop.f32.mrb[0].mxu0
      %v1157 = vadd.f32 0.0, %v1156
      %v1158 = vpop.f32.mrb[0].mxu0
      %1159 = vmatprep.mubr.bf16.mxu0 0
      %1160 = vmatmul.mubr.bf16.gmra.mrb[0].mxu0 %v776
      %v1161 = vpop.f32.mrb[0].mxu0
      %v1162 = vadd.f32 0.0, %v1161
      %v1163 = vpop.f32.mrb[0].mxu0
      %v1164 = vpop.f32.mrb[0].mxu0
      %v1165 = vadd.f32 0.0, %v1164
      %v1166 = vpop.f32.mrb[0].mxu0
      %1167 = vmatprep.mubr.bf16.mxu0 0
      %1168 = vmatmul.mubr.bf16.gmra.mrb[0].mxu0 %v779
      %v1169 = vpop.f32.mrb[0].mxu0
      %v1170 = vadd.f32 0.0, %v1169
      %v1171 = vpop.f32.mrb[0].mxu0
      %v1172 = vpop.f32.mrb[0].mxu0
      %v1173 = vadd.f32 0.0, %v1172
      %v1174 = vpop.f32.mrb[0].mxu0
      %1175 = vmatprep.mubr.bf16.mxu0 0
      %1176 = vmatmul.mubr.bf16.gmra.mrb[0].mxu0 %v782
      %v1177 = vpop.f32.mrb[0].mxu0
      %v1178 = vadd.f32 0.0, %v1177
      %v1179 = vpop.f32.mrb[0].mxu0
      %v1180 = vpop.f32.mrb[0].mxu0
      %v1181 = vadd.f32 0.0, %v1180
      %v1182 = vpop.f32.mrb[0].mxu0
      %1183 = vmatprep.mubr.bf16.mxu0 0
      %1184 = vmatmul.mubr.bf16.gmra.mrb[0].mxu0 %v785
      %v1185 = vpop.f32.mrb[0].mxu0
      %v1186 = vadd.f32 0.0, %v1185
      %v1187 = vpop.f32.mrb[0].mxu0
      %v1188 = vpop.f32.mrb[0].mxu0
      %v1189 = vadd.f32 0.0, %v1188
      %v1190 = vpop.f32.mrb[0].mxu0
      %1191 = vmatprep.mubr.bf16.mxu0 0
      %1192 = vmatmul.mubr.bf16.gmra.mrb[0].mxu0 %v788
      %v1193 = vpop.f32.mrb[0].mxu0
      %v1194 = vadd.f32 0.0, %v1193
      %v1195 = vpop.f32.mrb[0].mxu0
      %v1196 = vpop.f32.mrb[0].mxu0
      %v1197 = vadd.f32 0.0, %v1196
      %v1198 = vpop.f32.mrb[0].mxu0
      %1199 = vmatprep.mubr.bf16.mxu0 0
      %1200 = vmatmul.mubr.bf16.gmra.mrb[0].mxu0 %v791
      %v1201 = vpop.f32.mrb[0].mxu0
      %v1202 = vadd.f32 0.0, %v1201
      %v1203 = vpop.f32.mrb[0].mxu0
      %v1204 = vpop.f32.mrb[0].mxu0
      %v1205 = vadd.f32 0.0, %v1204
      %v1206 = vpop.f32.mrb[0].mxu0
      %1207 = vmatprep.mubr.bf16.mxu0 0
      %1208 = vmatmul.mubr.bf16.gmra.mrb[0].mxu0 %v794
      %v1209 = vpop.f32.mrb[0].mxu0
      %v1210 = vadd.f32 0.0, %v1209
      %v1211 = vpop.f32.mrb[0].mxu0
      %v1212 = vpop.f32.mrb[0].mxu0
      %v1213 = vadd.f32 0.0, %v1212
      %v1214 = vpop.f32.mrb[0].mxu0
      %1215 = vmatprep.mubr.bf16.mxu0 0
      %1216 = vmatmul.mubr.bf16.gmra.mrb[0].mxu0 %v797
      %v1217 = vpop.f32.mrb[0].mxu0
      %v1218 = vadd.f32 0.0, %v1217
      %v1219 = vpop.f32.mrb[0].mxu0
      %v1220 = vpop.f32.mrb[0].mxu0
      %v1221 = vadd.f32 0.0, %v1220
      %v1222 = vpop.f32.mrb[0].mxu0
      %1223 = vmatprep.mubr.bf16.mxu0 0
      %1224 = vmatmul.mubr.bf16.gmra.mrb[0].mxu0 %v800
      %v1225 = vpop.f32.mrb[0].mxu0
      %v1226 = vadd.f32 0.0, %v1225
      %v1227 = vpop.f32.mrb[0].mxu0
      %v1228 = vpop.f32.mrb[0].mxu0
      %v1229 = vadd.f32 0.0, %v1228
      %v1230 = vpop.f32.mrb[0].mxu0
      %1231 = vmatprep.mubr.bf16.mxu0 0
      %1232 = vmatmul.mubr.bf16.gmra.mrb[0].mxu0 %v803
      %v1233 = vpop.f32.mrb[0].mxu0
      %v1234 = vadd.f32 0.0, %v1233
      %v1235 = vpop.f32.mrb[0].mxu0
      %v1236 = vpop.f32.mrb[0].mxu0
      %v1237 = vadd.f32 0.0, %v1236
      %v1238 = vpop.f32.mrb[0].mxu0
      %1239 = vmatprep.mubr.bf16.mxu0 0
      %1240 = vmatmul.mubr.bf16.gmra.mrb[0].mxu0 %v806
      %v1241 = vpop.f32.mrb[0].mxu0
      %v1242 = vadd.f32 0.0, %v1241
      %v1243 = vpop.f32.mrb[0].mxu0
      %v1244 = vpop.f32.mrb[0].mxu0
      %v1245 = vadd.f32 0.0, %v1244
      %v1246 = vpop.f32.mrb[0].mxu0
      %1247 = vmatprep.mubr.bf16.mxu0 0
      %1248 = vmatmul.mubr.bf16.gmra.mrb[0].mxu0 %v809
      %v1249 = vpop.f32.mrb[0].mxu0
      %v1250 = vadd.f32 0.0, %v1249
      %v1251 = vpop.f32.mrb[0].mxu0
      %v1252 = vpop.f32.mrb[0].mxu0
      %v1253 = vadd.f32 0.0, %v1252
      %v1254 = vpop.f32.mrb[0].mxu0
      %1255 = vmatprep.mubr.bf16.mxu0 0
      %1256 = vmatmul.mubr.bf16.gmra.mrb[0].mxu0 %v812
      %v1257 = vpop.f32.mrb[0].mxu0
      %v1258 = vadd.f32 0.0, %v1257
      %v1259 = vpop.f32.mrb[0].mxu0
      %v1260 = vpop.f32.mrb[0].mxu0
      %v1261 = vadd.f32 0.0, %v1260
      %v1262 = vpop.f32.mrb[0].mxu0
      %1263 = vmatprep.mubr.bf16.mxu0 0
      %1264 = vmatmul.mubr.bf16.gmra.mrb[0].mxu0 %v815
      %v1265 = vpop.f32.mrb[0].mxu0
      %v1266 = vadd.f32 0.0, %v1265
      %v1267 = vpop.f32.mrb[0].mxu0
      %v1268 = vpop.f32.mrb[0].mxu0
      %v1269 = vadd.f32 0.0, %v1268
      %v1270 = vpop.f32.mrb[0].mxu0
      %1271 = vmatprep.mubr.bf16.mxu0 0
      %1272 = vmatmul.mubr.bf16.gmra.mrb[0].mxu0 %v818
      %v1273 = vpop.f32.mrb[0].mxu0
      %v1274 = vadd.f32 0.0, %v1273
      %v1275 = vpop.f32.mrb[0].mxu0
      %v1276 = vpop.f32.mrb[0].mxu0
      %v1277 = vadd.f32 0.0, %v1276
      %v1278 = vpop.f32.mrb[0].mxu0
      %1279 = vmatprep.mubr.bf16.mxu0 0
      %1280 = vmatmul.mubr.bf16.gmra.mrb[0].mxu0 %v821
      %v1281 = vpop.f32.mrb[0].mxu0
      %v1282 = vadd.f32 0.0, %v1281
      %v1283 = vpop.f32.mrb[0].mxu0
      %v1284 = vpop.f32.mrb[0].mxu0
      %v1285 = vadd.f32 0.0, %v1284
      %v1286 = vpop.f32.mrb[0].mxu0
      %1287 = vmatprep.mubr.bf16.mxu0 0
      %1288 = vmatmul.mubr.bf16.gmra.mrb[0].mxu0 %v824
      %v1289 = vpop.f32.mrb[0].mxu0
      %v1290 = vadd.f32 0.0, %v1289
      %v1291 = vpop.f32.mrb[0].mxu0
      %v1292 = vpop.f32.mrb[0].mxu0
      %v1293 = vadd.f32 0.0, %v1292
      %v1294 = vpop.f32.mrb[0].mxu0
      %1295 = vmatprep.mubr.bf16.mxu0 0
      %1296 = vmatmul.mubr.bf16.gmra.mrb[0].mxu0 %v827
      %v1297 = vpop.f32.mrb[0].mxu0
      %v1298 = vadd.f32 0.0, %v1297
      %v1299 = vpop.f32.mrb[0].mxu0
      %v1300 = vpop.f32.mrb[0].mxu0
      %v1301 = vadd.f32 0.0, %v1300
      %v1302 = vpop.f32.mrb[0].mxu0
      %1303 = vmatprep.mubr.bf16.mxu0 0
      %1304 = vmatmul.mubr.bf16.gmra.mrb[0].mxu0 %v830
      %v1305 = vpop.f32.mrb[0].mxu0
      %v1306 = vadd.f32 0.0, %v1305
      %v1307 = vpop.f32.mrb[0].mxu0
      %v1308 = vpop.f32.mrb[0].mxu0
      %v1309 = vadd.f32 0.0, %v1308
      %v1310 = vpop.f32.mrb[0].mxu0
      %1311 = vmatprep.mubr.bf16.mxu0 0
      %1312 = vmatmul.mubr.bf16.gmra.mrb[0].mxu0 %v833
      %v1313 = vpop.f32.mrb[0].mxu0
      %v1314 = vadd.f32 0.0, %v1313
      %v1315 = vpop.f32.mrb[0].mxu0
      %v1316 = vpop.f32.mrb[0].mxu0
      %v1317 = vadd.f32 0.0, %v1316
      %v1318 = vpop.f32.mrb[0].mxu0
      %1319 = vmatprep.mubr.bf16.mxu0 0
      %1320 = vmatmul.mubr.bf16.gmra.mrb[0].mxu0 %v836
      %v1321 = vpop.f32.mrb[0].mxu0
      %v1322 = vadd.f32 0.0, %v1321
      %v1323 = vpop.f32.mrb[0].mxu0
      %v1324 = vpop.f32.mrb[0].mxu0
      %v1325 = vadd.f32 0.0, %v1324
      %v1326 = vpop.f32.mrb[0].mxu0
      %1327 = vmatprep.mubr.bf16.mxu0 0
      %1328 = vmatmul.mubr.bf16.gmra.mrb[0].mxu0 %v839
      %v1329 = vpop.f32.mrb[0].mxu0
      %v1330 = vadd.f32 0.0, %v1329
      %v1331 = vpop.f32.mrb[0].mxu0
      %v1332 = vpop.f32.mrb[0].mxu0
      %v1333 = vadd.f32 0.0, %v1332
      %v1334 = vpop.f32.mrb[0].mxu0
      %1335 = vmatprep.mubr.bf16.mxu0 0
      %1336 = vmatmul.mubr.bf16.gmra.mrb[0].mxu0 %v842
      %v1337 = vpop.f32.mrb[0].mxu0
      %v1338 = vadd.f32 0.0, %v1337
      %v1339 = vpop.f32.mrb[0].mxu0
      %v1340 = vpop.f32.mrb[0].mxu0
      %v1341 = vadd.f32 0.0, %v1340
      %v1342 = vpop.f32.mrb[0].mxu0
      %1343 = vmatprep.mubr.bf16.mxu0 0
      %1344 = vmatmul.mubr.bf16.gmra.mrb[0].mxu0 %v845
      %v1345 = vpop.f32.mrb[0].mxu0
      %v1346 = vadd.f32 0.0, %v1345
      %v1347 = vpop.f32.mrb[0].mxu0
      %v1348 = vpop.f32.mrb[0].mxu0
      %v1349 = vadd.f32 0.0, %v1348
      %v1350 = vpop.f32.mrb[0].mxu0
      %1351 = vmatprep.mubr.bf16.mxu0 0
      %1352 = vmatmul.mubr.bf16.gmra.mrb[0].mxu0 %v848
      %v1353 = vpop.f32.mrb[0].mxu0
      %v1354 = vadd.f32 0.0, %v1353
      %v1355 = vpop.f32.mrb[0].mxu0
      %v1356 = vpop.f32.mrb[0].mxu0
      %v1357 = vadd.f32 0.0, %v1356
      %v1358 = vpop.f32.mrb[0].mxu0
      %1359 = vmatprep.mubr.bf16.mxu0 0
      %1360 = vmatmul.mubr.bf16.gmra.mrb[0].mxu0 %v851
      %v1361 = vpop.f32.mrb[0].mxu0
      %v1362 = vadd.f32 0.0, %v1361
      %v1363 = vpop.f32.mrb[0].mxu0
      %v1364 = vpop.f32.mrb[0].mxu0
      %v1365 = vadd.f32 0.0, %v1364
      %v1366 = vpop.f32.mrb[0].mxu0
      %1367 = vmatprep.mubr.bf16.mxu0 0
      %1368 = vmatmul.mubr.bf16.gmra.mrb[0].mxu0 %v854
      %v1369 = vpop.f32.mrb[0].mxu0
      %v1370 = vadd.f32 0.0, %v1369
      %v1371 = vpop.f32.mrb[0].mxu0
      %v1372 = vpop.f32.mrb[0].mxu0
      %v1373 = vadd.f32 0.0, %v1372
      %v1374 = vpop.f32.mrb[0].mxu0
      %1375 = vmatprep.mubr.bf16.mxu0 0
      %1376 = vmatmul.mubr.bf16.gmra.mrb[0].mxu0 %v857
      %v1377 = vpop.f32.mrb[0].mxu0
      %v1378 = vadd.f32 0.0, %v1377
      %v1379 = vpop.f32.mrb[0].mxu0
      %v1380 = vpop.f32.mrb[0].mxu0
      %v1381 = vadd.f32 0.0, %v1380
      %v1382 = vpop.f32.mrb[0].mxu0
      %1383 = vmatprep.mubr.bf16.mxu0 0
      %1384 = vmatmul.mubr.bf16.gmra.mrb[0].mxu0 %v860
      %v1385 = vpop.f32.mrb[0].mxu0
      %v1386 = vadd.f32 0.0, %v1385
      %v1387 = vpop.f32.mrb[0].mxu0
      %v1388 = vpop.f32.mrb[0].mxu0
      %v1389 = vadd.f32 0.0, %v1388
      %v1390 = vpop.f32.mrb[0].mxu0
      %1391 = vmatprep.mubr.bf16.mxu0 0
      %1392 = vmatmul.mubr.bf16.gmra.mrb[0].mxu0 %v863
      %v1393 = vpop.f32.mrb[0].mxu0
      %v1394 = vadd.f32 0.0, %v1393
      %v1395 = vpop.f32.mrb[0].mxu0
      %v1396 = vpop.f32.mrb[0].mxu0
      %v1397 = vadd.f32 0.0, %v1396
      %v1398 = vpop.f32.mrb[0].mxu0
      %1399 = vmatprep.mubr.bf16.mxu0 0
      %1400 = vmatmul.mubr.bf16.gmra.mrb[0].mxu0 %v866
      %v1401 = vpop.f32.mrb[0].mxu0
      %v1402 = vadd.f32 0.0, %v1401
      %v1403 = vpop.f32.mrb[0].mxu0
      %v1404 = vpop.f32.mrb[0].mxu0
      %v1405 = vadd.f32 0.0, %v1404
      %v1406 = vpop.f32.mrb[0].mxu0
      %1407 = vmatprep.mubr.bf16.mxu0 0
      %1408 = vmatmul.mubr.bf16.gmra.mrb[0].mxu0 %v869
      %v1409 = vpop.f32.mrb[0].mxu0
      %v1410 = vadd.f32 0.0, %v1409
      %v1411 = vpop.f32.mrb[0].mxu0
      %v1412 = vpop.f32.mrb[0].mxu0
      %v1413 = vadd.f32 0.0, %v1412
      %v1414 = vpop.f32.mrb[0].mxu0
      %1415 = vdwg.mxu0
      %v1416 = vlaneseq
      %v1417 = vshrl.u32 %v1416, 7
      %v1418 = vadd.s32 %v1417, 8
      %v1419 = vadd.s32 %v1417, 16
      %v1420 = vadd.s32 %v1417, 24
      %v1421 = vadd.s32 %v1417, 32
      %v1422 = vadd.s32 %v1417, 40
      %v1423 = vadd.s32 %v1417, 48
      %v1424 = vadd.s32 %v1417, 56
      %v1425 = vadd.s32 %v1417, 64
      %v1426 = vadd.s32 %v1417, 72
      %v1427 = vadd.s32 %v1417, 80
      %v1428 = vadd.s32 %v1417, 88
      %v1429 = vadd.s32 %v1417, 96
      %v1430 = vadd.s32 %v1417, 104
      %v1431 = vadd.s32 %v1417, 112
      %v1432 = vadd.s32 %v1417, 120
      %v1433 = vadd.s32 %v1417, 128
      %v1434 = vadd.s32 %v1417, 136
      %v1435 = vadd.s32 %v1417, 144
      %v1436 = vadd.s32 %v1417, 152
      %v1437 = vadd.s32 %v1417, 160
      %v1438 = vadd.s32 %v1417, 168
      %v1439 = vadd.s32 %v1417, 176
      %v1440 = vadd.s32 %v1417, 184
      %v1441 = vadd.s32 %v1417, 192
      %v1442 = vadd.s32 %v1417, 200
      %v1443 = vadd.s32 %v1417, 208
      %v1444 = vadd.s32 %v1417, 216
      %v1445 = vadd.s32 %v1417, 224
      %v1446 = vadd.s32 %v1417, 232
      %v1447 = vadd.s32 %v1417, 240
      %v1448 = vadd.s32 %v1417, 248
      %v1449 = vadd.s32 %v1417, 256
      %v1450 = vadd.s32 %v1417, 264
      %v1451 = vadd.s32 %v1417, 272
      %v1452 = vadd.s32 %v1417, 280
      %v1453 = vadd.s32 %v1417, 288
      %v1454 = vadd.s32 %v1417, 296
      %v1455 = vadd.s32 %v1417, 304
      %v1456 = vadd.s32 %v1417, 312
      %v1457 = vadd.s32 %v1417, 320
      %v1458 = vadd.s32 %v1417, 328
      %v1459 = vadd.s32 %v1417, 336
      %v1460 = vadd.s32 %v1417, 344
      %v1461 = vadd.s32 %v1417, 352
      %v1462 = vadd.s32 %v1417, 360
      %v1463 = vadd.s32 %v1417, 368
      %v1464 = vadd.s32 %v1417, 376
      %v1465 = vadd.s32 %v1417, 384
      %v1466 = vadd.s32 %v1417, 392
      %v1467 = vadd.s32 %v1417, 400
      %v1468 = vadd.s32 %v1417, 408
      %v1469 = vadd.s32 %v1417, 416
      %v1470 = vadd.s32 %v1417, 424
      %v1471 = vadd.s32 %v1417, 432
      %v1472 = vadd.s32 %v1417, 440
      %v1473 = vadd.s32 %v1417, 448
      %v1474 = vadd.s32 %v1417, 456
      %v1475 = vadd.s32 %v1417, 464
      %v1476 = vadd.s32 %v1417, 472
      %v1477 = vadd.s32 %v1417, 480
      %v1478 = vadd.s32 %v1417, 488
      %v1479 = vadd.s32 %v1417, 496
      %v1480 = vadd.s32 %v1417, 504
      %v1481 = vadd.s32 %v1417, 512
      %v1482 = vadd.s32 %v1417, 520
      %v1483 = vadd.s32 %v1417, 528
      %v1484 = vadd.s32 %v1417, 536
      %v1485 = vadd.s32 %v1417, 544
      %v1486 = vadd.s32 %v1417, 552
      %v1487 = vadd.s32 %v1417, 560
      %v1488 = vadd.s32 %v1417, 568
      %v1489 = vadd.s32 %v1417, 576
      %v1490 = vadd.s32 %v1417, 584
      %v1491 = vadd.s32 %v1417, 592
      %v1492 = vadd.s32 %v1417, 600
      %v1493 = vadd.s32 %v1417, 608
      %v1494 = vadd.s32 %v1417, 616
      %v1495 = vadd.s32 %v1417, 624
      %v1496 = vadd.s32 %v1417, 632
      %v1497 = vadd.s32 %v1417, 640
      %v1498 = vadd.s32 %v1417, 648
      %v1499 = vadd.s32 %v1417, 656
      %v1500 = vadd.s32 %v1417, 664
      %v1501 = vadd.s32 %v1417, 672
      %v1502 = vadd.s32 %v1417, 680
      %v1503 = vadd.s32 %v1417, 688
      %v1504 = vadd.s32 %v1417, 696
      %v1505 = vadd.s32 %v1417, 704
      %v1506 = vadd.s32 %v1417, 712
      %v1507 = vadd.s32 %v1417, 720
      %v1508 = vadd.s32 %v1417, 728
      %v1509 = vadd.s32 %v1417, 736
      %v1510 = vadd.s32 %v1417, 744
      %v1511 = vadd.s32 %v1417, 752
      %v1512 = vadd.s32 %v1417, 760
      %v1513 = vadd.s32 %v1417, 768
      %v1514 = vadd.s32 %v1417, 776
      %v1515 = vadd.s32 %v1417, 784
      %v1516 = vadd.s32 %v1417, 792
      %v1517 = vadd.s32 %v1417, 800
      %v1518 = vadd.s32 %v1417, 808
      %v1519 = vadd.s32 %v1417, 816
      %v1520 = vadd.s32 %v1417, 824
      %v1521 = vadd.s32 %v1417, 832
      %v1522 = vadd.s32 %v1417, 840
      %v1523 = vadd.s32 %v1417, 848
      %v1524 = vadd.s32 %v1417, 856
      %v1525 = vadd.s32 %v1417, 864
      %v1526 = vadd.s32 %v1417, 872
      %v1527 = vadd.s32 %v1417, 880
      %v1528 = vadd.s32 %v1417, 888
      %v1529 = vadd.s32 %v1417, 896
      %v1530 = vadd.s32 %v1417, 904
      %v1531 = vadd.s32 %v1417, 912
      %v1532 = vadd.s32 %v1417, 920
      %v1533 = vadd.s32 %v1417, 928
      %v1534 = vadd.s32 %v1417, 936
      %v1535 = vadd.s32 %v1417, 944
      %v1536 = vadd.s32 %v1417, 952
      %v1537 = vadd.s32 %v1417, 960
      %v1538 = vadd.s32 %v1417, 968
      %v1539 = vadd.s32 %v1417, 976
      %v1540 = vadd.s32 %v1417, 984
      %v1541 = vadd.s32 %v1417, 992
      %v1542 = vadd.s32 %v1417, 1000
      %v1543 = vadd.s32 %v1417, 1008
      %v1544 = vadd.s32 %v1417, 1016
      %s1545 = smul.u32 %s20, 1024
      %v1546 = vstv %s1545
      %v1547 = vadd.s32 %v1417, %v1546
      %v1548 = vadd.s32 %v1418, %v1546
      %v1549 = vadd.s32 %v1419, %v1546
      %v1550 = vadd.s32 %v1420, %v1546
      %v1551 = vadd.s32 %v1421, %v1546
      %v1552 = vadd.s32 %v1422, %v1546
      %v1553 = vadd.s32 %v1423, %v1546
      %v1554 = vadd.s32 %v1424, %v1546
      %v1555 = vadd.s32 %v1425, %v1546
      %v1556 = vadd.s32 %v1426, %v1546
      %v1557 = vadd.s32 %v1427, %v1546
      %v1558 = vadd.s32 %v1428, %v1546
      %v1559 = vadd.s32 %v1429, %v1546
      %v1560 = vadd.s32 %v1430, %v1546
      %v1561 = vadd.s32 %v1431, %v1546
      %v1562 = vadd.s32 %v1432, %v1546
      %v1563 = vadd.s32 %v1433, %v1546
      %v1564 = vadd.s32 %v1434, %v1546
      %v1565 = vadd.s32 %v1435, %v1546
      %v1566 = vadd.s32 %v1436, %v1546
      %v1567 = vadd.s32 %v1437, %v1546
      %v1568 = vadd.s32 %v1438, %v1546
      %v1569 = vadd.s32 %v1439, %v1546
      %v1570 = vadd.s32 %v1440, %v1546
      %v1571 = vadd.s32 %v1441, %v1546
      %v1572 = vadd.s32 %v1442, %v1546
      %v1573 = vadd.s32 %v1443, %v1546
      %v1574 = vadd.s32 %v1444, %v1546
      %v1575 = vadd.s32 %v1445, %v1546
      %v1576 = vadd.s32 %v1446, %v1546
      %v1577 = vadd.s32 %v1447, %v1546
      %v1578 = vadd.s32 %v1448, %v1546
      %v1579 = vadd.s32 %v1449, %v1546
      %v1580 = vadd.s32 %v1450, %v1546
      %v1581 = vadd.s32 %v1451, %v1546
      %v1582 = vadd.s32 %v1452, %v1546
      %v1583 = vadd.s32 %v1453, %v1546
      %v1584 = vadd.s32 %v1454, %v1546
      %v1585 = vadd.s32 %v1455, %v1546
      %v1586 = vadd.s32 %v1456, %v1546
      %v1587 = vadd.s32 %v1457, %v1546
      %v1588 = vadd.s32 %v1458, %v1546
      %v1589 = vadd.s32 %v1459, %v1546
      %v1590 = vadd.s32 %v1460, %v1546
      %v1591 = vadd.s32 %v1461, %v1546
      %v1592 = vadd.s32 %v1462, %v1546
      %v1593 = vadd.s32 %v1463, %v1546
      %v1594 = vadd.s32 %v1464, %v1546
      %v1595 = vadd.s32 %v1465, %v1546
      %v1596 = vadd.s32 %v1466, %v1546
      %v1597 = vadd.s32 %v1467, %v1546
      %v1598 = vadd.s32 %v1468, %v1546
      %v1599 = vadd.s32 %v1469, %v1546
      %v1600 = vadd.s32 %v1470, %v1546
      %v1601 = vadd.s32 %v1471, %v1546
      %v1602 = vadd.s32 %v1472, %v1546
      %v1603 = vadd.s32 %v1473, %v1546
      %v1604 = vadd.s32 %v1474, %v1546
      %v1605 = vadd.s32 %v1475, %v1546
      %v1606 = vadd.s32 %v1476, %v1546
      %v1607 = vadd.s32 %v1477, %v1546
      %v1608 = vadd.s32 %v1478, %v1546
      %v1609 = vadd.s32 %v1479, %v1546
      %v1610 = vadd.s32 %v1480, %v1546
      %v1611 = vadd.s32 %v1481, %v1546
      %v1612 = vadd.s32 %v1482, %v1546
      %v1613 = vadd.s32 %v1483, %v1546
      %v1614 = vadd.s32 %v1484, %v1546
      %v1615 = vadd.s32 %v1485, %v1546
      %v1616 = vadd.s32 %v1486, %v1546
      %v1617 = vadd.s32 %v1487, %v1546
      %v1618 = vadd.s32 %v1488, %v1546
      %v1619 = vadd.s32 %v1489, %v1546
      %v1620 = vadd.s32 %v1490, %v1546
      %v1621 = vadd.s32 %v1491, %v1546
      %v1622 = vadd.s32 %v1492, %v1546
      %v1623 = vadd.s32 %v1493, %v1546
      %v1624 = vadd.s32 %v1494, %v1546
      %v1625 = vadd.s32 %v1495, %v1546
      %v1626 = vadd.s32 %v1496, %v1546
      %v1627 = vadd.s32 %v1497, %v1546
      %v1628 = vadd.s32 %v1498, %v1546
      %v1629 = vadd.s32 %v1499, %v1546
      %v1630 = vadd.s32 %v1500, %v1546
      %v1631 = vadd.s32 %v1501, %v1546
      %v1632 = vadd.s32 %v1502, %v1546
      %v1633 = vadd.s32 %v1503, %v1546
      %v1634 = vadd.s32 %v1504, %v1546
      %v1635 = vadd.s32 %v1505, %v1546
      %v1636 = vadd.s32 %v1506, %v1546
      %v1637 = vadd.s32 %v1507, %v1546
      %v1638 = vadd.s32 %v1508, %v1546
      %v1639 = vadd.s32 %v1509, %v1546
      %v1640 = vadd.s32 %v1510, %v1546
      %v1641 = vadd.s32 %v1511, %v1546
      %v1642 = vadd.s32 %v1512, %v1546
      %v1643 = vadd.s32 %v1513, %v1546
      %v1644 = vadd.s32 %v1514, %v1546
      %v1645 = vadd.s32 %v1515, %v1546
      %v1646 = vadd.s32 %v1516, %v1546
      %v1647 = vadd.s32 %v1517, %v1546
      %v1648 = vadd.s32 %v1518, %v1546
      %v1649 = vadd.s32 %v1519, %v1546
      %v1650 = vadd.s32 %v1520, %v1546
      %v1651 = vadd.s32 %v1521, %v1546
      %v1652 = vadd.s32 %v1522, %v1546
      %v1653 = vadd.s32 %v1523, %v1546
      %v1654 = vadd.s32 %v1524, %v1546
      %v1655 = vadd.s32 %v1525, %v1546
      %v1656 = vadd.s32 %v1526, %v1546
      %v1657 = vadd.s32 %v1527, %v1546
      %v1658 = vadd.s32 %v1528, %v1546
      %v1659 = vadd.s32 %v1529, %v1546
      %v1660 = vadd.s32 %v1530, %v1546
      %v1661 = vadd.s32 %v1531, %v1546
      %v1662 = vadd.s32 %v1532, %v1546
      %v1663 = vadd.s32 %v1533, %v1546
      %v1664 = vadd.s32 %v1534, %v1546
      %v1665 = vadd.s32 %v1535, %v1546
      %v1666 = vadd.s32 %v1536, %v1546
      %v1667 = vadd.s32 %v1537, %v1546
      %v1668 = vadd.s32 %v1538, %v1546
      %v1669 = vadd.s32 %v1539, %v1546
      %v1670 = vadd.s32 %v1540, %v1546
      %v1671 = vadd.s32 %v1541, %v1546
      %v1672 = vadd.s32 %v1542, %v1546
      %v1673 = vadd.s32 %v1543, %v1546
      %v1674 = vadd.s32 %v1544, %v1546
      %vm1675 = vcmp.lt.s32.totalorder %v1547, 2000
      %vm1676 = vcmp.lt.s32.totalorder %v1548, 2000
      %vm1677 = vcmp.lt.s32.totalorder %v1549, 2000
      %vm1678 = vcmp.lt.s32.totalorder %v1550, 2000
      %vm1679 = vcmp.lt.s32.totalorder %v1551, 2000
      %vm1680 = vcmp.lt.s32.totalorder %v1552, 2000
      %vm1681 = vcmp.lt.s32.totalorder %v1553, 2000
      %vm1682 = vcmp.lt.s32.totalorder %v1554, 2000
      %vm1683 = vcmp.lt.s32.totalorder %v1555, 2000
      %vm1684 = vcmp.lt.s32.totalorder %v1556, 2000
      %vm1685 = vcmp.lt.s32.totalorder %v1557, 2000
      %vm1686 = vcmp.lt.s32.totalorder %v1558, 2000
      %vm1687 = vcmp.lt.s32.totalorder %v1559, 2000
      %vm1688 = vcmp.lt.s32.totalorder %v1560, 2000
      %vm1689 = vcmp.lt.s32.totalorder %v1561, 2000
      %vm1690 = vcmp.lt.s32.totalorder %v1562, 2000
      %vm1691 = vcmp.lt.s32.totalorder %v1563, 2000
      %vm1692 = vcmp.lt.s32.totalorder %v1564, 2000
      %vm1693 = vcmp.lt.s32.totalorder %v1565, 2000
      %vm1694 = vcmp.lt.s32.totalorder %v1566, 2000
      %vm1695 = vcmp.lt.s32.totalorder %v1567, 2000
      %vm1696 = vcmp.lt.s32.totalorder %v1568, 2000
      %vm1697 = vcmp.lt.s32.totalorder %v1569, 2000
      %vm1698 = vcmp.lt.s32.totalorder %v1570, 2000
      %vm1699 = vcmp.lt.s32.totalorder %v1571, 2000
      %vm1700 = vcmp.lt.s32.totalorder %v1572, 2000
      %vm1701 = vcmp.lt.s32.totalorder %v1573, 2000
      %vm1702 = vcmp.lt.s32.totalorder %v1574, 2000
      %vm1703 = vcmp.lt.s32.totalorder %v1575, 2000
      %vm1704 = vcmp.lt.s32.totalorder %v1576, 2000
      %vm1705 = vcmp.lt.s32.totalorder %v1577, 2000
      %vm1706 = vcmp.lt.s32.totalorder %v1578, 2000
      %vm1707 = vcmp.lt.s32.totalorder %v1579, 2000
      %vm1708 = vcmp.lt.s32.totalorder %v1580, 2000
      %vm1709 = vcmp.lt.s32.totalorder %v1581, 2000
      %vm1710 = vcmp.lt.s32.totalorder %v1582, 2000
      %vm1711 = vcmp.lt.s32.totalorder %v1583, 2000
      %vm1712 = vcmp.lt.s32.totalorder %v1584, 2000
      %vm1713 = vcmp.lt.s32.totalorder %v1585, 2000
      %vm1714 = vcmp.lt.s32.totalorder %v1586, 2000
      %vm1715 = vcmp.lt.s32.totalorder %v1587, 2000
      %vm1716 = vcmp.lt.s32.totalorder %v1588, 2000
      %vm1717 = vcmp.lt.s32.totalorder %v1589, 2000
      %vm1718 = vcmp.lt.s32.totalorder %v1590, 2000
      %vm1719 = vcmp.lt.s32.totalorder %v1591, 2000
      %vm1720 = vcmp.lt.s32.totalorder %v1592, 2000
      %vm1721 = vcmp.lt.s32.totalorder %v1593, 2000
      %vm1722 = vcmp.lt.s32.totalorder %v1594, 2000
      %vm1723 = vcmp.lt.s32.totalorder %v1595, 2000
      %vm1724 = vcmp.lt.s32.totalorder %v1596, 2000
      %vm1725 = vcmp.lt.s32.totalorder %v1597, 2000
      %vm1726 = vcmp.lt.s32.totalorder %v1598, 2000
      %vm1727 = vcmp.lt.s32.totalorder %v1599, 2000
      %vm1728 = vcmp.lt.s32.totalorder %v1600, 2000
      %vm1729 = vcmp.lt.s32.totalorder %v1601, 2000
      %vm1730 = vcmp.lt.s32.totalorder %v1602, 2000
      %vm1731 = vcmp.lt.s32.totalorder %v1603, 2000
      %vm1732 = vcmp.lt.s32.totalorder %v1604, 2000
      %vm1733 = vcmp.lt.s32.totalorder %v1605, 2000
      %vm1734 = vcmp.lt.s32.totalorder %v1606, 2000
      %vm1735 = vcmp.lt.s32.totalorder %v1607, 2000
      %vm1736 = vcmp.lt.s32.totalorder %v1608, 2000
      %vm1737 = vcmp.lt.s32.totalorder %v1609, 2000
      %vm1738 = vcmp.lt.s32.totalorder %v1610, 2000
      %vm1739 = vcmp.lt.s32.totalorder %v1611, 2000
      %vm1740 = vcmp.lt.s32.totalorder %v1612, 2000
      %vm1741 = vcmp.lt.s32.totalorder %v1613, 2000
      %vm1742 = vcmp.lt.s32.totalorder %v1614, 2000
      %vm1743 = vcmp.lt.s32.totalorder %v1615, 2000
      %vm1744 = vcmp.lt.s32.totalorder %v1616, 2000
      %vm1745 = vcmp.lt.s32.totalorder %v1617, 2000
      %vm1746 = vcmp.lt.s32.totalorder %v1618, 2000
      %vm1747 = vcmp.lt.s32.totalorder %v1619, 2000
      %vm1748 = vcmp.lt.s32.totalorder %v1620, 2000
      %vm1749 = vcmp.lt.s32.totalorder %v1621, 2000
      %vm1750 = vcmp.lt.s32.totalorder %v1622, 2000
      %vm1751 = vcmp.lt.s32.totalorder %v1623, 2000
      %vm1752 = vcmp.lt.s32.totalorder %v1624, 2000
      %vm1753 = vcmp.lt.s32.totalorder %v1625, 2000
      %vm1754 = vcmp.lt.s32.totalorder %v1626, 2000
      %vm1755 = vcmp.lt.s32.totalorder %v1627, 2000
      %vm1756 = vcmp.lt.s32.totalorder %v1628, 2000
      %vm1757 = vcmp.lt.s32.totalorder %v1629, 2000
      %vm1758 = vcmp.lt.s32.totalorder %v1630, 2000
      %vm1759 = vcmp.lt.s32.totalorder %v1631, 2000
      %vm1760 = vcmp.lt.s32.totalorder %v1632, 2000
      %vm1761 = vcmp.lt.s32.totalorder %v1633, 2000
      %vm1762 = vcmp.lt.s32.totalorder %v1634, 2000
      %vm1763 = vcmp.lt.s32.totalorder %v1635, 2000
      %vm1764 = vcmp.lt.s32.totalorder %v1636, 2000
      %vm1765 = vcmp.lt.s32.totalorder %v1637, 2000
      %vm1766 = vcmp.lt.s32.totalorder %v1638, 2000
      %vm1767 = vcmp.lt.s32.totalorder %v1639, 2000
      %vm1768 = vcmp.lt.s32.totalorder %v1640, 2000
      %vm1769 = vcmp.lt.s32.totalorder %v1641, 2000
      %vm1770 = vcmp.lt.s32.totalorder %v1642, 2000
      %vm1771 = vcmp.lt.s32.totalorder %v1643, 2000
      %vm1772 = vcmp.lt.s32.totalorder %v1644, 2000
      %vm1773 = vcmp.lt.s32.totalorder %v1645, 2000
      %vm1774 = vcmp.lt.s32.totalorder %v1646, 2000
      %vm1775 = vcmp.lt.s32.totalorder %v1647, 2000
      %vm1776 = vcmp.lt.s32.totalorder %v1648, 2000
      %vm1777 = vcmp.lt.s32.totalorder %v1649, 2000
      %vm1778 = vcmp.lt.s32.totalorder %v1650, 2000
      %vm1779 = vcmp.lt.s32.totalorder %v1651, 2000
      %vm1780 = vcmp.lt.s32.totalorder %v1652, 2000
      %vm1781 = vcmp.lt.s32.totalorder %v1653, 2000
      %vm1782 = vcmp.lt.s32.totalorder %v1654, 2000
      %vm1783 = vcmp.lt.s32.totalorder %v1655, 2000
      %vm1784 = vcmp.lt.s32.totalorder %v1656, 2000
      %vm1785 = vcmp.lt.s32.totalorder %v1657, 2000
      %vm1786 = vcmp.lt.s32.totalorder %v1658, 2000
      %vm1787 = vcmp.lt.s32.totalorder %v1659, 2000
      %vm1788 = vcmp.lt.s32.totalorder %v1660, 2000
      %vm1789 = vcmp.lt.s32.totalorder %v1661, 2000
      %vm1790 = vcmp.lt.s32.totalorder %v1662, 2000
      %vm1791 = vcmp.lt.s32.totalorder %v1663, 2000
      %vm1792 = vcmp.lt.s32.totalorder %v1664, 2000
      %vm1793 = vcmp.lt.s32.totalorder %v1665, 2000
      %vm1794 = vcmp.lt.s32.totalorder %v1666, 2000
      %vm1795 = vcmp.lt.s32.totalorder %v1667, 2000
      %vm1796 = vcmp.lt.s32.totalorder %v1668, 2000
      %vm1797 = vcmp.lt.s32.totalorder %v1669, 2000
      %vm1798 = vcmp.lt.s32.totalorder %v1670, 2000
      %vm1799 = vcmp.lt.s32.totalorder %v1671, 2000
      %vm1800 = vcmp.lt.s32.totalorder %v1672, 2000
      %vm1801 = vcmp.lt.s32.totalorder %v1673, 2000
      %vm1802 = vcmp.lt.s32.totalorder %v1674, 2000
      %v1803 = vsel %vm1675, %v906, -inf
      %v1804 = vsel %vm1676, %v909, -inf
      %v1805 = vsel %vm1677, %v914, -inf
      %v1806 = vsel %vm1678, %v917, -inf
      %v1807 = vsel %vm1679, %v922, -inf
      %v1808 = vsel %vm1680, %v925, -inf
      %v1809 = vsel %vm1681, %v930, -inf
      %v1810 = vsel %vm1682, %v933, -inf
      %v1811 = vsel %vm1683, %v938, -inf
      %v1812 = vsel %vm1684, %v941, -inf
      %v1813 = vsel %vm1685, %v946, -inf
      %v1814 = vsel %vm1686, %v949, -inf
      %v1815 = vsel %vm1687, %v954, -inf
      %v1816 = vsel %vm1688, %v957, -inf
      %v1817 = vsel %vm1689, %v962, -inf
      %v1818 = vsel %vm1690, %v965, -inf
      %v1819 = vsel %vm1691, %v970, -inf
      %v1820 = vsel %vm1692, %v973, -inf
      %v1821 = vsel %vm1693, %v978, -inf
      %v1822 = vsel %vm1694, %v981, -inf
      %v1823 = vsel %vm1695, %v986, -inf
      %v1824 = vsel %vm1696, %v989, -inf
      %v1825 = vsel %vm1697, %v994, -inf
      %v1826 = vsel %vm1698, %v997, -inf
      %v1827 = vsel %vm1699, %v1002, -inf
      %v1828 = vsel %vm1700, %v1005, -inf
      %v1829 = vsel %vm1701, %v1010, -inf
      %v1830 = vsel %vm1702, %v1013, -inf
      %v1831 = vsel %vm1703, %v1018, -inf
      %v1832 = vsel %vm1704, %v1021, -inf
      %v1833 = vsel %vm1705, %v1026, -inf
      %v1834 = vsel %vm1706, %v1029, -inf
      %v1835 = vsel %vm1707, %v1034, -inf
      %v1836 = vsel %vm1708, %v1037, -inf
      %v1837 = vsel %vm1709, %v1042, -inf
      %v1838 = vsel %vm1710, %v1045, -inf
      %v1839 = vsel %vm1711, %v1050, -inf
      %v1840 = vsel %vm1712, %v1053, -inf
      %v1841 = vsel %vm1713, %v1058, -inf
      %v1842 = vsel %vm1714, %v1061, -inf
      %v1843 = vsel %vm1715, %v1066, -inf
      %v1844 = vsel %vm1716, %v1069, -inf
      %v1845 = vsel %vm1717, %v1074, -inf
      %v1846 = vsel %vm1718, %v1077, -inf
      %v1847 = vsel %vm1719, %v1082, -inf
      %v1848 = vsel %vm1720, %v1085, -inf
      %v1849 = vsel %vm1721, %v1090, -inf
      %v1850 = vsel %vm1722, %v1093, -inf
      %v1851 = vsel %vm1723, %v1098, -inf
      %v1852 = vsel %vm1724, %v1101, -inf
      %v1853 = vsel %vm1725, %v1106, -inf
      %v1854 = vsel %vm1726, %v1109, -inf
      %v1855 = vsel %vm1727, %v1114, -inf
      %v1856 = vsel %vm1728, %v1117, -inf
      %v1857 = vsel %vm1729, %v1122, -inf
      %v1858 = vsel %vm1730, %v1125, -inf
      %v1859 = vsel %vm1731, %v1130, -inf
      %v1860 = vsel %vm1732, %v1133, -inf
      %v1861 = vsel %vm1733, %v1138, -inf
      %v1862 = vsel %vm1734, %v1141, -inf
      %v1863 = vsel %vm1735, %v1146, -inf
      %v1864 = vsel %vm1736, %v1149, -inf
      %v1865 = vsel %vm1737, %v1154, -inf
      %v1866 = vsel %vm1738, %v1157, -inf
      %v1867 = vsel %vm1739, %v1162, -inf
      %v1868 = vsel %vm1740, %v1165, -inf
      %v1869 = vsel %vm1741, %v1170, -inf
      %v1870 = vsel %vm1742, %v1173, -inf
      %v1871 = vsel %vm1743, %v1178, -inf
      %v1872 = vsel %vm1744, %v1181, -inf
      %v1873 = vsel %vm1745, %v1186, -inf
      %v1874 = vsel %vm1746, %v1189, -inf
      %v1875 = vsel %vm1747, %v1194, -inf
      %v1876 = vsel %vm1748, %v1197, -inf
      %v1877 = vsel %vm1749, %v1202, -inf
      %v1878 = vsel %vm1750, %v1205, -inf
      %v1879 = vsel %vm1751, %v1210, -inf
      %v1880 = vsel %vm1752, %v1213, -inf
      %v1881 = vsel %vm1753, %v1218, -inf
      %v1882 = vsel %vm1754, %v1221, -inf
      %v1883 = vsel %vm1755, %v1226, -inf
      %v1884 = vsel %vm1756, %v1229, -inf
      %v1885 = vsel %vm1757, %v1234, -inf
      %v1886 = vsel %vm1758, %v1237, -inf
      %v1887 = vsel %vm1759, %v1242, -inf
      %v1888 = vsel %vm1760, %v1245, -inf
      %v1889 = vsel %vm1761, %v1250, -inf
      %v1890 = vsel %vm1762, %v1253, -inf
      %v1891 = vsel %vm1763, %v1258, -inf
      %v1892 = vsel %vm1764, %v1261, -inf
      %v1893 = vsel %vm1765, %v1266, -inf
      %v1894 = vsel %vm1766, %v1269, -inf
      %v1895 = vsel %vm1767, %v1274, -inf
      %v1896 = vsel %vm1768, %v1277, -inf
      %v1897 = vsel %vm1769, %v1282, -inf
      %v1898 = vsel %vm1770, %v1285, -inf
      %v1899 = vsel %vm1771, %v1290, -inf
      %v1900 = vsel %vm1772, %v1293, -inf
      %v1901 = vsel %vm1773, %v1298, -inf
      %v1902 = vsel %vm1774, %v1301, -inf
      %v1903 = vsel %vm1775, %v1306, -inf
      %v1904 = vsel %vm1776, %v1309, -inf
      %v1905 = vsel %vm1777, %v1314, -inf
      %v1906 = vsel %vm1778, %v1317, -inf
      %v1907 = vsel %vm1779, %v1322, -inf
      %v1908 = vsel %vm1780, %v1325, -inf
      %v1909 = vsel %vm1781, %v1330, -inf
      %v1910 = vsel %vm1782, %v1333, -inf
      %v1911 = vsel %vm1783, %v1338, -inf
      %v1912 = vsel %vm1784, %v1341, -inf
      %v1913 = vsel %vm1785, %v1346, -inf
      %v1914 = vsel %vm1786, %v1349, -inf
      %v1915 = vsel %vm1787, %v1354, -inf
      %v1916 = vsel %vm1788, %v1357, -inf
      %v1917 = vsel %vm1789, %v1362, -inf
      %v1918 = vsel %vm1790, %v1365, -inf
      %v1919 = vsel %vm1791, %v1370, -inf
      %v1920 = vsel %vm1792, %v1373, -inf
      %v1921 = vsel %vm1793, %v1378, -inf
      %v1922 = vsel %vm1794, %v1381, -inf
      %v1923 = vsel %vm1795, %v1386, -inf
      %v1924 = vsel %vm1796, %v1389, -inf
      %v1925 = vsel %vm1797, %v1394, -inf
      %v1926 = vsel %vm1798, %v1397, -inf
      %v1927 = vsel %vm1799, %v1402, -inf
      %v1928 = vsel %vm1800, %v1405, -inf
      %v1929 = vsel %vm1801, %v1410, -inf
      %v1930 = vsel %vm1802, %v1413, -inf
      %v1931 = vmax.f32 %v1803, %v1807
      %v1932 = vmax.f32 %v1804, %v1808
      %v1933 = vmax.f32 %v1805, %v1809
      %v1934 = vmax.f32 %v1806, %v1810
      %v1935 = vmax.f32 %v1931, %v1811
      %v1936 = vmax.f32 %v1932, %v1812
      %v1937 = vmax.f32 %v1933, %v1813
      %v1938 = vmax.f32 %v1934, %v1814
      %v1939 = vmax.f32 %v1935, %v1815
      %v1940 = vmax.f32 %v1936, %v1816
      %v1941 = vmax.f32 %v1937, %v1817
      %v1942 = vmax.f32 %v1938, %v1818
      %v1943 = vmax.f32 %v1939, %v1819
      %v1944 = vmax.f32 %v1940, %v1820
      %v1945 = vmax.f32 %v1941, %v1821
      %v1946 = vmax.f32 %v1942, %v1822
      %v1947 = vmax.f32 %v1943, %v1823
      %v1948 = vmax.f32 %v1944, %v1824
      %v1949 = vmax.f32 %v1945, %v1825
      %v1950 = vmax.f32 %v1946, %v1826
      %v1951 = vmax.f32 %v1947, %v1827
      %v1952 = vmax.f32 %v1948, %v1828
      %v1953 = vmax.f32 %v1949, %v1829
      %v1954 = vmax.f32 %v1950, %v1830
      %v1955 = vmax.f32 %v1951, %v1831
      %v1956 = vmax.f32 %v1952, %v1832
      %v1957 = vmax.f32 %v1953, %v1833
      %v1958 = vmax.f32 %v1954, %v1834
      %v1959 = vmax.f32 %v1955, %v1835
      %v1960 = vmax.f32 %v1956, %v1836
      %v1961 = vmax.f32 %v1957, %v1837
      %v1962 = vmax.f32 %v1958, %v1838
      %v1963 = vmax.f32 %v1959, %v1839
      %v1964 = vmax.f32 %v1960, %v1840
      %v1965 = vmax.f32 %v1961, %v1841
      %v1966 = vmax.f32 %v1962, %v1842
      %v1967 = vmax.f32 %v1963, %v1843
      %v1968 = vmax.f32 %v1964, %v1844
      %v1969 = vmax.f32 %v1965, %v1845
      %v1970 = vmax.f32 %v1966, %v1846
      %v1971 = vmax.f32 %v1967, %v1847
      %v1972 = vmax.f32 %v1968, %v1848
      %v1973 = vmax.f32 %v1969, %v1849
      %v1974 = vmax.f32 %v1970, %v1850
      %v1975 = vmax.f32 %v1971, %v1851
      %v1976 = vmax.f32 %v1972, %v1852
      %v1977 = vmax.f32 %v1973, %v1853
      %v1978 = vmax.f32 %v1974, %v1854
      %v1979 = vmax.f32 %v1975, %v1855
      %v1980 = vmax.f32 %v1976, %v1856
      %v1981 = vmax.f32 %v1977, %v1857
      %v1982 = vmax.f32 %v1978, %v1858
      %v1983 = vmax.f32 %v1979, %v1859
      %v1984 = vmax.f32 %v1980, %v1860
      %v1985 = vmax.f32 %v1981, %v1861
      %v1986 = vmax.f32 %v1982, %v1862
      %v1987 = vmax.f32 %v1983, %v1863
      %v1988 = vmax.f32 %v1984, %v1864
      %v1989 = vmax.f32 %v1985, %v1865
      %v1990 = vmax.f32 %v1986, %v1866
      %v1991 = vmax.f32 %v1987, %v1867
      %v1992 = vmax.f32 %v1988, %v1868
      %v1993 = vmax.f32 %v1989, %v1869
      %v1994 = vmax.f32 %v1990, %v1870
      %v1995 = vmax.f32 %v1991, %v1871
      %v1996 = vmax.f32 %v1992, %v1872
      %v1997 = vmax.f32 %v1993, %v1873
      %v1998 = vmax.f32 %v1994, %v1874
      %v1999 = vmax.f32 %v1995, %v1875
      %v2000 = vmax.f32 %v1996, %v1876
      %v2001 = vmax.f32 %v1997, %v1877
      %v2002 = vmax.f32 %v1998, %v1878
      %v2003 = vmax.f32 %v1999, %v1879
      %v2004 = vmax.f32 %v2000, %v1880
      %v2005 = vmax.f32 %v2001, %v1881
      %v2006 = vmax.f32 %v2002, %v1882
      %v2007 = vmax.f32 %v2003, %v1883
      %v2008 = vmax.f32 %v2004, %v1884
      %v2009 = vmax.f32 %v2005, %v1885
      %v2010 = vmax.f32 %v2006, %v1886
      %v2011 = vmax.f32 %v2007, %v1887
      %v2012 = vmax.f32 %v2008, %v1888
      %v2013 = vmax.f32 %v2009, %v1889
      %v2014 = vmax.f32 %v2010, %v1890
      %v2015 = vmax.f32 %v2011, %v1891
      %v2016 = vmax.f32 %v2012, %v1892
      %v2017 = vmax.f32 %v2013, %v1893
      %v2018 = vmax.f32 %v2014, %v1894
      %v2019 = vmax.f32 %v2015, %v1895
      %v2020 = vmax.f32 %v2016, %v1896
      %v2021 = vmax.f32 %v2017, %v1897
      %v2022 = vmax.f32 %v2018, %v1898
      %v2023 = vmax.f32 %v2019, %v1899
      %v2024 = vmax.f32 %v2020, %v1900
      %v2025 = vmax.f32 %v2021, %v1901
      %v2026 = vmax.f32 %v2022, %v1902
      %v2027 = vmax.f32 %v2023, %v1903
      %v2028 = vmax.f32 %v2024, %v1904
      %v2029 = vmax.f32 %v2025, %v1905
      %v2030 = vmax.f32 %v2026, %v1906
      %v2031 = vmax.f32 %v2027, %v1907
      %v2032 = vmax.f32 %v2028, %v1908
      %v2033 = vmax.f32 %v2029, %v1909
      %v2034 = vmax.f32 %v2030, %v1910
      %v2035 = vmax.f32 %v2031, %v1911
      %v2036 = vmax.f32 %v2032, %v1912
      %v2037 = vmax.f32 %v2033, %v1913
      %v2038 = vmax.f32 %v2034, %v1914
      %v2039 = vmax.f32 %v2035, %v1915
      %v2040 = vmax.f32 %v2036, %v1916
      %v2041 = vmax.f32 %v2037, %v1917
      %v2042 = vmax.f32 %v2038, %v1918
      %v2043 = vmax.f32 %v2039, %v1919
      %v2044 = vmax.f32 %v2040, %v1920
      %v2045 = vmax.f32 %v2041, %v1921
      %v2046 = vmax.f32 %v2042, %v1922
      %v2047 = vmax.f32 %v2043, %v1923
      %v2048 = vmax.f32 %v2044, %v1924
      %v2049 = vmax.f32 %v2045, %v1925
      %v2050 = vmax.f32 %v2046, %v1926
      %v2051 = vmax.f32 %v2047, %v1927
      %v2052 = vmax.f32 %v2048, %v1928
      %v2053 = vmax.f32 %v2049, %v1929
      %v2054 = vmax.f32 %v2050, %v1930
      %v2055 = vmax.f32 %v2051, %v2052
      %v2056 = vmax.f32 %v2053, %v2054
      %v2057 = vmax.f32 %v2055, %v2056
      %v2058 = vrot.slane %v2057, 4
      %v2059 = vmax.f32 %v2057, %v2058
      %v2060 = vrot.slane %v2059, 2
      %v2061 = vmax.f32 %v2059, %v2060
      %v2062 = vrot.slane %v2061, 1
      %v2063 = vmax.f32 %v2061, %v2062
      %vm2064 = vcmp.eq.f32.partialorder %v1803, %v2063
      %vm2065 = vcmp.eq.f32.partialorder %v1804, %v2063
      %vm2066 = vcmp.eq.f32.partialorder %v1805, %v2063
      %vm2067 = vcmp.eq.f32.partialorder %v1806, %v2063
      %vm2068 = vcmp.eq.f32.partialorder %v1807, %v2063
      %vm2069 = vcmp.eq.f32.partialorder %v1808, %v2063
      %vm2070 = vcmp.eq.f32.partialorder %v1809, %v2063
      %vm2071 = vcmp.eq.f32.partialorder %v1810, %v2063
      %vm2072 = vcmp.eq.f32.partialorder %v1811, %v2063
      %vm2073 = vcmp.eq.f32.partialorder %v1812, %v2063
      %vm2074 = vcmp.eq.f32.partialorder %v1813, %v2063
      %vm2075 = vcmp.eq.f32.partialorder %v1814, %v2063
      %vm2076 = vcmp.eq.f32.partialorder %v1815, %v2063
      %vm2077 = vcmp.eq.f32.partialorder %v1816, %v2063
      %vm2078 = vcmp.eq.f32.partialorder %v1817, %v2063
      %vm2079 = vcmp.eq.f32.partialorder %v1818, %v2063
      %vm2080 = vcmp.eq.f32.partialorder %v1819, %v2063
      %vm2081 = vcmp.eq.f32.partialorder %v1820, %v2063
      %vm2082 = vcmp.eq.f32.partialorder %v1821, %v2063
      %vm2083 = vcmp.eq.f32.partialorder %v1822, %v2063
      %vm2084 = vcmp.eq.f32.partialorder %v1823, %v2063
      %vm2085 = vcmp.eq.f32.partialorder %v1824, %v2063
      %vm2086 = vcmp.eq.f32.partialorder %v1825, %v2063
      %vm2087 = vcmp.eq.f32.partialorder %v1826, %v2063
      %vm2088 = vcmp.eq.f32.partialorder %v1827, %v2063
      %vm2089 = vcmp.eq.f32.partialorder %v1828, %v2063
      %vm2090 = vcmp.eq.f32.partialorder %v1829, %v2063
      %vm2091 = vcmp.eq.f32.partialorder %v1830, %v2063
      %vm2092 = vcmp.eq.f32.partialorder %v1831, %v2063
      %vm2093 = vcmp.eq.f32.partialorder %v1832, %v2063
      %vm2094 = vcmp.eq.f32.partialorder %v1833, %v2063
      %vm2095 = vcmp.eq.f32.partialorder %v1834, %v2063
      %vm2096 = vcmp.eq.f32.partialorder %v1835, %v2063
      %vm2097 = vcmp.eq.f32.partialorder %v1836, %v2063
      %vm2098 = vcmp.eq.f32.partialorder %v1837, %v2063
      %vm2099 = vcmp.eq.f32.partialorder %v1838, %v2063
      %vm2100 = vcmp.eq.f32.partialorder %v1839, %v2063
      %vm2101 = vcmp.eq.f32.partialorder %v1840, %v2063
      %vm2102 = vcmp.eq.f32.partialorder %v1841, %v2063
      %vm2103 = vcmp.eq.f32.partialorder %v1842, %v2063
      %vm2104 = vcmp.eq.f32.partialorder %v1843, %v2063
      %vm2105 = vcmp.eq.f32.partialorder %v1844, %v2063
      %vm2106 = vcmp.eq.f32.partialorder %v1845, %v2063
      %vm2107 = vcmp.eq.f32.partialorder %v1846, %v2063
      %vm2108 = vcmp.eq.f32.partialorder %v1847, %v2063
      %vm2109 = vcmp.eq.f32.partialorder %v1848, %v2063
      %vm2110 = vcmp.eq.f32.partialorder %v1849, %v2063
      %vm2111 = vcmp.eq.f32.partialorder %v1850, %v2063
      %vm2112 = vcmp.eq.f32.partialorder %v1851, %v2063
      %vm2113 = vcmp.eq.f32.partialorder %v1852, %v2063
      %vm2114 = vcmp.eq.f32.partialorder %v1853, %v2063
      %vm2115 = vcmp.eq.f32.partialorder %v1854, %v2063
      %vm2116 = vcmp.eq.f32.partialorder %v1855, %v2063
      %vm2117 = vcmp.eq.f32.partialorder %v1856, %v2063
      %vm2118 = vcmp.eq.f32.partialorder %v1857, %v2063
      %vm2119 = vcmp.eq.f32.partialorder %v1858, %v2063
      %vm2120 = vcmp.eq.f32.partialorder %v1859, %v2063
      %vm2121 = vcmp.eq.f32.partialorder %v1860, %v2063
      %vm2122 = vcmp.eq.f32.partialorder %v1861, %v2063
      %vm2123 = vcmp.eq.f32.partialorder %v1862, %v2063
      %vm2124 = vcmp.eq.f32.partialorder %v1863, %v2063
      %vm2125 = vcmp.eq.f32.partialorder %v1864, %v2063
      %vm2126 = vcmp.eq.f32.partialorder %v1865, %v2063
      %vm2127 = vcmp.eq.f32.partialorder %v1866, %v2063
      %vm2128 = vcmp.eq.f32.partialorder %v1867, %v2063
      %vm2129 = vcmp.eq.f32.partialorder %v1868, %v2063
      %vm2130 = vcmp.eq.f32.partialorder %v1869, %v2063
      %vm2131 = vcmp.eq.f32.partialorder %v1870, %v2063
      %vm2132 = vcmp.eq.f32.partialorder %v1871, %v2063
      %vm2133 = vcmp.eq.f32.partialorder %v1872, %v2063
      %vm2134 = vcmp.eq.f32.partialorder %v1873, %v2063
      %vm2135 = vcmp.eq.f32.partialorder %v1874, %v2063
      %vm2136 = vcmp.eq.f32.partialorder %v1875, %v2063
      %vm2137 = vcmp.eq.f32.partialorder %v1876, %v2063
      %vm2138 = vcmp.eq.f32.partialorder %v1877, %v2063
      %vm2139 = vcmp.eq.f32.partialorder %v1878, %v2063
      %vm2140 = vcmp.eq.f32.partialorder %v1879, %v2063
      %vm2141 = vcmp.eq.f32.partialorder %v1880, %v2063
      %vm2142 = vcmp.eq.f32.partialorder %v1881, %v2063
      %vm2143 = vcmp.eq.f32.partialorder %v1882, %v2063
      %vm2144 = vcmp.eq.f32.partialorder %v1883, %v2063
      %vm2145 = vcmp.eq.f32.partialorder %v1884, %v2063
      %vm2146 = vcmp.eq.f32.partialorder %v1885, %v2063
      %vm2147 = vcmp.eq.f32.partialorder %v1886, %v2063
      %vm2148 = vcmp.eq.f32.partialorder %v1887, %v2063
      %vm2149 = vcmp.eq.f32.partialorder %v1888, %v2063
      %vm2150 = vcmp.eq.f32.partialorder %v1889, %v2063
      %vm2151 = vcmp.eq.f32.partialorder %v1890, %v2063
      %vm2152 = vcmp.eq.f32.partialorder %v1891, %v2063
      %vm2153 = vcmp.eq.f32.partialorder %v1892, %v2063
      %vm2154 = vcmp.eq.f32.partialorder %v1893, %v2063
      %vm2155 = vcmp.eq.f32.partialorder %v1894, %v2063
      %vm2156 = vcmp.eq.f32.partialorder %v1895, %v2063
      %vm2157 = vcmp.eq.f32.partialorder %v1896, %v2063
      %vm2158 = vcmp.eq.f32.partialorder %v1897, %v2063
      %vm2159 = vcmp.eq.f32.partialorder %v1898, %v2063
      %vm2160 = vcmp.eq.f32.partialorder %v1899, %v2063
      %vm2161 = vcmp.eq.f32.partialorder %v1900, %v2063
      %vm2162 = vcmp.eq.f32.partialorder %v1901, %v2063
      %vm2163 = vcmp.eq.f32.partialorder %v1902, %v2063
      %vm2164 = vcmp.eq.f32.partialorder %v1903, %v2063
      %vm2165 = vcmp.eq.f32.partialorder %v1904, %v2063
      %vm2166 = vcmp.eq.f32.partialorder %v1905, %v2063
      %vm2167 = vcmp.eq.f32.partialorder %v1906, %v2063
      %vm2168 = vcmp.eq.f32.partialorder %v1907, %v2063
      %vm2169 = vcmp.eq.f32.partialorder %v1908, %v2063
      %vm2170 = vcmp.eq.f32.partialorder %v1909, %v2063
      %vm2171 = vcmp.eq.f32.partialorder %v1910, %v2063
      %vm2172 = vcmp.eq.f32.partialorder %v1911, %v2063
      %vm2173 = vcmp.eq.f32.partialorder %v1912, %v2063
      %vm2174 = vcmp.eq.f32.partialorder %v1913, %v2063
      %vm2175 = vcmp.eq.f32.partialorder %v1914, %v2063
      %vm2176 = vcmp.eq.f32.partialorder %v1915, %v2063
      %vm2177 = vcmp.eq.f32.partialorder %v1916, %v2063
      %vm2178 = vcmp.eq.f32.partialorder %v1917, %v2063
      %vm2179 = vcmp.eq.f32.partialorder %v1918, %v2063
      %vm2180 = vcmp.eq.f32.partialorder %v1919, %v2063
      %vm2181 = vcmp.eq.f32.partialorder %v1920, %v2063
      %vm2182 = vcmp.eq.f32.partialorder %v1921, %v2063
      %vm2183 = vcmp.eq.f32.partialorder %v1922, %v2063
      %vm2184 = vcmp.eq.f32.partialorder %v1923, %v2063
      %vm2185 = vcmp.eq.f32.partialorder %v1924, %v2063
      %vm2186 = vcmp.eq.f32.partialorder %v1925, %v2063
      %vm2187 = vcmp.eq.f32.partialorder %v1926, %v2063
      %vm2188 = vcmp.eq.f32.partialorder %v1927, %v2063
      %vm2189 = vcmp.eq.f32.partialorder %v1928, %v2063
      %vm2190 = vcmp.eq.f32.partialorder %v1929, %v2063
      %vm2191 = vcmp.eq.f32.partialorder %v1930, %v2063
      %v2192 = vsel %vm2064, %v1547, 1073741824
      %v2193 = vsel %vm2065, %v1548, 1073741824
      %v2194 = vsel %vm2066, %v1549, 1073741824
      %v2195 = vsel %vm2067, %v1550, 1073741824
      %v2196 = vsel %vm2068, %v1551, 1073741824
      %v2197 = vsel %vm2069, %v1552, 1073741824
      %v2198 = vsel %vm2070, %v1553, 1073741824
      %v2199 = vsel %vm2071, %v1554, 1073741824
      %v2200 = vsel %vm2072, %v1555, 1073741824
      %v2201 = vsel %vm2073, %v1556, 1073741824
      %v2202 = vsel %vm2074, %v1557, 1073741824
      %v2203 = vsel %vm2075, %v1558, 1073741824
      %v2204 = vsel %vm2076, %v1559, 1073741824
      %v2205 = vsel %vm2077, %v1560, 1073741824
      %v2206 = vsel %vm2078, %v1561, 1073741824
      %v2207 = vsel %vm2079, %v1562, 1073741824
      %v2208 = vsel %vm2080, %v1563, 1073741824
      %v2209 = vsel %vm2081, %v1564, 1073741824
      %v2210 = vsel %vm2082, %v1565, 1073741824
      %v2211 = vsel %vm2083, %v1566, 1073741824
      %v2212 = vsel %vm2084, %v1567, 1073741824
      %v2213 = vsel %vm2085, %v1568, 1073741824
      %v2214 = vsel %vm2086, %v1569, 1073741824
      %v2215 = vsel %vm2087, %v1570, 1073741824
      %v2216 = vsel %vm2088, %v1571, 1073741824
      %v2217 = vsel %vm2089, %v1572, 1073741824
      %v2218 = vsel %vm2090, %v1573, 1073741824
      %v2219 = vsel %vm2091, %v1574, 1073741824
      %v2220 = vsel %vm2092, %v1575, 1073741824
      %v2221 = vsel %vm2093, %v1576, 1073741824
      %v2222 = vsel %vm2094, %v1577, 1073741824
      %v2223 = vsel %vm2095, %v1578, 1073741824
      %v2224 = vsel %vm2096, %v1579, 1073741824
      %v2225 = vsel %vm2097, %v1580, 1073741824
      %v2226 = vsel %vm2098, %v1581, 1073741824
      %v2227 = vsel %vm2099, %v1582, 1073741824
      %v2228 = vsel %vm2100, %v1583, 1073741824
      %v2229 = vsel %vm2101, %v1584, 1073741824
      %v2230 = vsel %vm2102, %v1585, 1073741824
      %v2231 = vsel %vm2103, %v1586, 1073741824
      %v2232 = vsel %vm2104, %v1587, 1073741824
      %v2233 = vsel %vm2105, %v1588, 1073741824
      %v2234 = vsel %vm2106, %v1589, 1073741824
      %v2235 = vsel %vm2107, %v1590, 1073741824
      %v2236 = vsel %vm2108, %v1591, 1073741824
      %v2237 = vsel %vm2109, %v1592, 1073741824
      %v2238 = vsel %vm2110, %v1593, 1073741824
      %v2239 = vsel %vm2111, %v1594, 1073741824
      %v2240 = vsel %vm2112, %v1595, 1073741824
      %v2241 = vsel %vm2113, %v1596, 1073741824
      %v2242 = vsel %vm2114, %v1597, 1073741824
      %v2243 = vsel %vm2115, %v1598, 1073741824
      %v2244 = vsel %vm2116, %v1599, 1073741824
      %v2245 = vsel %vm2117, %v1600, 1073741824
      %v2246 = vsel %vm2118, %v1601, 1073741824
      %v2247 = vsel %vm2119, %v1602, 1073741824
      %v2248 = vsel %vm2120, %v1603, 1073741824
      %v2249 = vsel %vm2121, %v1604, 1073741824
      %v2250 = vsel %vm2122, %v1605, 1073741824
      %v2251 = vsel %vm2123, %v1606, 1073741824
      %v2252 = vsel %vm2124, %v1607, 1073741824
      %v2253 = vsel %vm2125, %v1608, 1073741824
      %v2254 = vsel %vm2126, %v1609, 1073741824
      %v2255 = vsel %vm2127, %v1610, 1073741824
      %v2256 = vsel %vm2128, %v1611, 1073741824
      %v2257 = vsel %vm2129, %v1612, 1073741824
      %v2258 = vsel %vm2130, %v1613, 1073741824
      %v2259 = vsel %vm2131, %v1614, 1073741824
      %v2260 = vsel %vm2132, %v1615, 1073741824
      %v2261 = vsel %vm2133, %v1616, 1073741824
      %v2262 = vsel %vm2134, %v1617, 1073741824
      %v2263 = vsel %vm2135, %v1618, 1073741824
      %v2264 = vsel %vm2136, %v1619, 1073741824
      %v2265 = vsel %vm2137, %v1620, 1073741824
      %v2266 = vsel %vm2138, %v1621, 1073741824
      %v2267 = vsel %vm2139, %v1622, 1073741824
      %v2268 = vsel %vm2140, %v1623, 1073741824
      %v2269 = vsel %vm2141, %v1624, 1073741824
      %v2270 = vsel %vm2142, %v1625, 1073741824
      %v2271 = vsel %vm2143, %v1626, 1073741824
      %v2272 = vsel %vm2144, %v1627, 1073741824
      %v2273 = vsel %vm2145, %v1628, 1073741824
      %v2274 = vsel %vm2146, %v1629, 1073741824
      %v2275 = vsel %vm2147, %v1630, 1073741824
      %v2276 = vsel %vm2148, %v1631, 1073741824
      %v2277 = vsel %vm2149, %v1632, 1073741824
      %v2278 = vsel %vm2150, %v1633, 1073741824
      %v2279 = vsel %vm2151, %v1634, 1073741824
      %v2280 = vsel %vm2152, %v1635, 1073741824
      %v2281 = vsel %vm2153, %v1636, 1073741824
      %v2282 = vsel %vm2154, %v1637, 1073741824
      %v2283 = vsel %vm2155, %v1638, 1073741824
      %v2284 = vsel %vm2156, %v1639, 1073741824
      %v2285 = vsel %vm2157, %v1640, 1073741824
      %v2286 = vsel %vm2158, %v1641, 1073741824
      %v2287 = vsel %vm2159, %v1642, 1073741824
      %v2288 = vsel %vm2160, %v1643, 1073741824
      %v2289 = vsel %vm2161, %v1644, 1073741824
      %v2290 = vsel %vm2162, %v1645, 1073741824
      %v2291 = vsel %vm2163, %v1646, 1073741824
      %v2292 = vsel %vm2164, %v1647, 1073741824
      %v2293 = vsel %vm2165, %v1648, 1073741824
      %v2294 = vsel %vm2166, %v1649, 1073741824
      %v2295 = vsel %vm2167, %v1650, 1073741824
      %v2296 = vsel %vm2168, %v1651, 1073741824
      %v2297 = vsel %vm2169, %v1652, 1073741824
      %v2298 = vsel %vm2170, %v1653, 1073741824
      %v2299 = vsel %vm2171, %v1654, 1073741824
      %v2300 = vsel %vm2172, %v1655, 1073741824
      %v2301 = vsel %vm2173, %v1656, 1073741824
      %v2302 = vsel %vm2174, %v1657, 1073741824
      %v2303 = vsel %vm2175, %v1658, 1073741824
      %v2304 = vsel %vm2176, %v1659, 1073741824
      %v2305 = vsel %vm2177, %v1660, 1073741824
      %v2306 = vsel %vm2178, %v1661, 1073741824
      %v2307 = vsel %vm2179, %v1662, 1073741824
      %v2308 = vsel %vm2180, %v1663, 1073741824
      %v2309 = vsel %vm2181, %v1664, 1073741824
      %v2310 = vsel %vm2182, %v1665, 1073741824
      %v2311 = vsel %vm2183, %v1666, 1073741824
      %v2312 = vsel %vm2184, %v1667, 1073741824
      %v2313 = vsel %vm2185, %v1668, 1073741824
      %v2314 = vsel %vm2186, %v1669, 1073741824
      %v2315 = vsel %vm2187, %v1670, 1073741824
      %v2316 = vsel %vm2188, %v1671, 1073741824
      %v2317 = vsel %vm2189, %v1672, 1073741824
      %v2318 = vsel %vm2190, %v1673, 1073741824
      %v2319 = vsel %vm2191, %v1674, 1073741824
      %vm2320 = vcmp.lt.s32.totalorder %v2192, %v2196
      %v2321 = vsel %vm2320, %v2192, %v2196
      %vm2322 = vcmp.lt.s32.totalorder %v2193, %v2197
      %v2323 = vsel %vm2322, %v2193, %v2197
      %vm2324 = vcmp.lt.s32.totalorder %v2194, %v2198
      %v2325 = vsel %vm2324, %v2194, %v2198
      %vm2326 = vcmp.lt.s32.totalorder %v2195, %v2199
      %v2327 = vsel %vm2326, %v2195, %v2199
      %vm2328 = vcmp.lt.s32.totalorder %v2321, %v2200
      %v2329 = vsel %vm2328, %v2321, %v2200
      %vm2330 = vcmp.lt.s32.totalorder %v2323, %v2201
      %v2331 = vsel %vm2330, %v2323, %v2201
      %vm2332 = vcmp.lt.s32.totalorder %v2325, %v2202
      %v2333 = vsel %vm2332, %v2325, %v2202
      %vm2334 = vcmp.lt.s32.totalorder %v2327, %v2203
      %v2335 = vsel %vm2334, %v2327, %v2203
      %vm2336 = vcmp.lt.s32.totalorder %v2329, %v2204
      %v2337 = vsel %vm2336, %v2329, %v2204
      %vm2338 = vcmp.lt.s32.totalorder %v2331, %v2205
      %v2339 = vsel %vm2338, %v2331, %v2205
      %vm2340 = vcmp.lt.s32.totalorder %v2333, %v2206
      %v2341 = vsel %vm2340, %v2333, %v2206
      %vm2342 = vcmp.lt.s32.totalorder %v2335, %v2207
      %v2343 = vsel %vm2342, %v2335, %v2207
      %vm2344 = vcmp.lt.s32.totalorder %v2337, %v2208
      %v2345 = vsel %vm2344, %v2337, %v2208
      %vm2346 = vcmp.lt.s32.totalorder %v2339, %v2209
      %v2347 = vsel %vm2346, %v2339, %v2209
      %vm2348 = vcmp.lt.s32.totalorder %v2341, %v2210
      %v2349 = vsel %vm2348, %v2341, %v2210
      %vm2350 = vcmp.lt.s32.totalorder %v2343, %v2211
      %v2351 = vsel %vm2350, %v2343, %v2211
      %vm2352 = vcmp.lt.s32.totalorder %v2345, %v2212
      %v2353 = vsel %vm2352, %v2345, %v2212
      %vm2354 = vcmp.lt.s32.totalorder %v2347, %v2213
      %v2355 = vsel %vm2354, %v2347, %v2213
      %vm2356 = vcmp.lt.s32.totalorder %v2349, %v2214
      %v2357 = vsel %vm2356, %v2349, %v2214
      %vm2358 = vcmp.lt.s32.totalorder %v2351, %v2215
      %v2359 = vsel %vm2358, %v2351, %v2215
      %vm2360 = vcmp.lt.s32.totalorder %v2353, %v2216
      %v2361 = vsel %vm2360, %v2353, %v2216
      %vm2362 = vcmp.lt.s32.totalorder %v2355, %v2217
      %v2363 = vsel %vm2362, %v2355, %v2217
      %vm2364 = vcmp.lt.s32.totalorder %v2357, %v2218
      %v2365 = vsel %vm2364, %v2357, %v2218
      %vm2366 = vcmp.lt.s32.totalorder %v2359, %v2219
      %v2367 = vsel %vm2366, %v2359, %v2219
      %vm2368 = vcmp.lt.s32.totalorder %v2361, %v2220
      %v2369 = vsel %vm2368, %v2361, %v2220
      %vm2370 = vcmp.lt.s32.totalorder %v2363, %v2221
      %v2371 = vsel %vm2370, %v2363, %v2221
      %vm2372 = vcmp.lt.s32.totalorder %v2365, %v2222
      %v2373 = vsel %vm2372, %v2365, %v2222
      %vm2374 = vcmp.lt.s32.totalorder %v2367, %v2223
      %v2375 = vsel %vm2374, %v2367, %v2223
      %vm2376 = vcmp.lt.s32.totalorder %v2369, %v2224
      %v2377 = vsel %vm2376, %v2369, %v2224
      %vm2378 = vcmp.lt.s32.totalorder %v2371, %v2225
      %v2379 = vsel %vm2378, %v2371, %v2225
      %vm2380 = vcmp.lt.s32.totalorder %v2373, %v2226
      %v2381 = vsel %vm2380, %v2373, %v2226
      %vm2382 = vcmp.lt.s32.totalorder %v2375, %v2227
      %v2383 = vsel %vm2382, %v2375, %v2227
      %vm2384 = vcmp.lt.s32.totalorder %v2377, %v2228
      %v2385 = vsel %vm2384, %v2377, %v2228
      %vm2386 = vcmp.lt.s32.totalorder %v2379, %v2229
      %v2387 = vsel %vm2386, %v2379, %v2229
      %vm2388 = vcmp.lt.s32.totalorder %v2381, %v2230
      %v2389 = vsel %vm2388, %v2381, %v2230
      %vm2390 = vcmp.lt.s32.totalorder %v2383, %v2231
      %v2391 = vsel %vm2390, %v2383, %v2231
      %vm2392 = vcmp.lt.s32.totalorder %v2385, %v2232
      %v2393 = vsel %vm2392, %v2385, %v2232
      %vm2394 = vcmp.lt.s32.totalorder %v2387, %v2233
      %v2395 = vsel %vm2394, %v2387, %v2233
      %vm2396 = vcmp.lt.s32.totalorder %v2389, %v2234
      %v2397 = vsel %vm2396, %v2389, %v2234
      %vm2398 = vcmp.lt.s32.totalorder %v2391, %v2235
      %v2399 = vsel %vm2398, %v2391, %v2235
      %vm2400 = vcmp.lt.s32.totalorder %v2393, %v2236
      %v2401 = vsel %vm2400, %v2393, %v2236
      %vm2402 = vcmp.lt.s32.totalorder %v2395, %v2237
      %v2403 = vsel %vm2402, %v2395, %v2237
      %vm2404 = vcmp.lt.s32.totalorder %v2397, %v2238
      %v2405 = vsel %vm2404, %v2397, %v2238
      %vm2406 = vcmp.lt.s32.totalorder %v2399, %v2239
      %v2407 = vsel %vm2406, %v2399, %v2239
      %vm2408 = vcmp.lt.s32.totalorder %v2401, %v2240
      %v2409 = vsel %vm2408, %v2401, %v2240
      %vm2410 = vcmp.lt.s32.totalorder %v2403, %v2241
      %v2411 = vsel %vm2410, %v2403, %v2241
      %vm2412 = vcmp.lt.s32.totalorder %v2405, %v2242
      %v2413 = vsel %vm2412, %v2405, %v2242
      %vm2414 = vcmp.lt.s32.totalorder %v2407, %v2243
      %v2415 = vsel %vm2414, %v2407, %v2243
      %vm2416 = vcmp.lt.s32.totalorder %v2409, %v2244
      %v2417 = vsel %vm2416, %v2409, %v2244
      %vm2418 = vcmp.lt.s32.totalorder %v2411, %v2245
      %v2419 = vsel %vm2418, %v2411, %v2245
      %vm2420 = vcmp.lt.s32.totalorder %v2413, %v2246
      %v2421 = vsel %vm2420, %v2413, %v2246
      %vm2422 = vcmp.lt.s32.totalorder %v2415, %v2247
      %v2423 = vsel %vm2422, %v2415, %v2247
      %vm2424 = vcmp.lt.s32.totalorder %v2417, %v2248
      %v2425 = vsel %vm2424, %v2417, %v2248
      %vm2426 = vcmp.lt.s32.totalorder %v2419, %v2249
      %v2427 = vsel %vm2426, %v2419, %v2249
      %vm2428 = vcmp.lt.s32.totalorder %v2421, %v2250
      %v2429 = vsel %vm2428, %v2421, %v2250
      %vm2430 = vcmp.lt.s32.totalorder %v2423, %v2251
      %v2431 = vsel %vm2430, %v2423, %v2251
      %vm2432 = vcmp.lt.s32.totalorder %v2425, %v2252
      %v2433 = vsel %vm2432, %v2425, %v2252
      %vm2434 = vcmp.lt.s32.totalorder %v2427, %v2253
      %v2435 = vsel %vm2434, %v2427, %v2253
      %vm2436 = vcmp.lt.s32.totalorder %v2429, %v2254
      %v2437 = vsel %vm2436, %v2429, %v2254
      %vm2438 = vcmp.lt.s32.totalorder %v2431, %v2255
      %v2439 = vsel %vm2438, %v2431, %v2255
      %vm2440 = vcmp.lt.s32.totalorder %v2433, %v2256
      %v2441 = vsel %vm2440, %v2433, %v2256
      %vm2442 = vcmp.lt.s32.totalorder %v2435, %v2257
      %v2443 = vsel %vm2442, %v2435, %v2257
      %vm2444 = vcmp.lt.s32.totalorder %v2437, %v2258
      %v2445 = vsel %vm2444, %v2437, %v2258
      %vm2446 = vcmp.lt.s32.totalorder %v2439, %v2259
      %v2447 = vsel %vm2446, %v2439, %v2259
      %vm2448 = vcmp.lt.s32.totalorder %v2441, %v2260
      %v2449 = vsel %vm2448, %v2441, %v2260
      %vm2450 = vcmp.lt.s32.totalorder %v2443, %v2261
      %v2451 = vsel %vm2450, %v2443, %v2261
      %vm2452 = vcmp.lt.s32.totalorder %v2445, %v2262
      %v2453 = vsel %vm2452, %v2445, %v2262
      %vm2454 = vcmp.lt.s32.totalorder %v2447, %v2263
      %v2455 = vsel %vm2454, %v2447, %v2263
      %vm2456 = vcmp.lt.s32.totalorder %v2449, %v2264
      %v2457 = vsel %vm2456, %v2449, %v2264
      %vm2458 = vcmp.lt.s32.totalorder %v2451, %v2265
      %v2459 = vsel %vm2458, %v2451, %v2265
      %vm2460 = vcmp.lt.s32.totalorder %v2453, %v2266
      %v2461 = vsel %vm2460, %v2453, %v2266
      %vm2462 = vcmp.lt.s32.totalorder %v2455, %v2267
      %v2463 = vsel %vm2462, %v2455, %v2267
      %vm2464 = vcmp.lt.s32.totalorder %v2457, %v2268
      %v2465 = vsel %vm2464, %v2457, %v2268
      %vm2466 = vcmp.lt.s32.totalorder %v2459, %v2269
      %v2467 = vsel %vm2466, %v2459, %v2269
      %vm2468 = vcmp.lt.s32.totalorder %v2461, %v2270
      %v2469 = vsel %vm2468, %v2461, %v2270
      %vm2470 = vcmp.lt.s32.totalorder %v2463, %v2271
      %v2471 = vsel %vm2470, %v2463, %v2271
      %vm2472 = vcmp.lt.s32.totalorder %v2465, %v2272
      %v2473 = vsel %vm2472, %v2465, %v2272
      %vm2474 = vcmp.lt.s32.totalorder %v2467, %v2273
      %v2475 = vsel %vm2474, %v2467, %v2273
      %vm2476 = vcmp.lt.s32.totalorder %v2469, %v2274
      %v2477 = vsel %vm2476, %v2469, %v2274
      %vm2478 = vcmp.lt.s32.totalorder %v2471, %v2275
      %v2479 = vsel %vm2478, %v2471, %v2275
      %vm2480 = vcmp.lt.s32.totalorder %v2473, %v2276
      %v2481 = vsel %vm2480, %v2473, %v2276
      %vm2482 = vcmp.lt.s32.totalorder %v2475, %v2277
      %v2483 = vsel %vm2482, %v2475, %v2277
      %vm2484 = vcmp.lt.s32.totalorder %v2477, %v2278
      %v2485 = vsel %vm2484, %v2477, %v2278
      %vm2486 = vcmp.lt.s32.totalorder %v2479, %v2279
      %v2487 = vsel %vm2486, %v2479, %v2279
      %vm2488 = vcmp.lt.s32.totalorder %v2481, %v2280
      %v2489 = vsel %vm2488, %v2481, %v2280
      %vm2490 = vcmp.lt.s32.totalorder %v2483, %v2281
      %v2491 = vsel %vm2490, %v2483, %v2281
      %vm2492 = vcmp.lt.s32.totalorder %v2485, %v2282
      %v2493 = vsel %vm2492, %v2485, %v2282
      %vm2494 = vcmp.lt.s32.totalorder %v2487, %v2283
      %v2495 = vsel %vm2494, %v2487, %v2283
      %vm2496 = vcmp.lt.s32.totalorder %v2489, %v2284
      %v2497 = vsel %vm2496, %v2489, %v2284
      %vm2498 = vcmp.lt.s32.totalorder %v2491, %v2285
      %v2499 = vsel %vm2498, %v2491, %v2285
      %vm2500 = vcmp.lt.s32.totalorder %v2493, %v2286
      %v2501 = vsel %vm2500, %v2493, %v2286
      %vm2502 = vcmp.lt.s32.totalorder %v2495, %v2287
      %v2503 = vsel %vm2502, %v2495, %v2287
      %vm2504 = vcmp.lt.s32.totalorder %v2497, %v2288
      %v2505 = vsel %vm2504, %v2497, %v2288
      %vm2506 = vcmp.lt.s32.totalorder %v2499, %v2289
      %v2507 = vsel %vm2506, %v2499, %v2289
      %vm2508 = vcmp.lt.s32.totalorder %v2501, %v2290
      %v2509 = vsel %vm2508, %v2501, %v2290
      %vm2510 = vcmp.lt.s32.totalorder %v2503, %v2291
      %v2511 = vsel %vm2510, %v2503, %v2291
      %vm2512 = vcmp.lt.s32.totalorder %v2505, %v2292
      %v2513 = vsel %vm2512, %v2505, %v2292
      %vm2514 = vcmp.lt.s32.totalorder %v2507, %v2293
      %v2515 = vsel %vm2514, %v2507, %v2293
      %vm2516 = vcmp.lt.s32.totalorder %v2509, %v2294
      %v2517 = vsel %vm2516, %v2509, %v2294
      %vm2518 = vcmp.lt.s32.totalorder %v2511, %v2295
      %v2519 = vsel %vm2518, %v2511, %v2295
      %vm2520 = vcmp.lt.s32.totalorder %v2513, %v2296
      %v2521 = vsel %vm2520, %v2513, %v2296
      %vm2522 = vcmp.lt.s32.totalorder %v2515, %v2297
      %v2523 = vsel %vm2522, %v2515, %v2297
      %vm2524 = vcmp.lt.s32.totalorder %v2517, %v2298
      %v2525 = vsel %vm2524, %v2517, %v2298
      %vm2526 = vcmp.lt.s32.totalorder %v2519, %v2299
      %v2527 = vsel %vm2526, %v2519, %v2299
      %vm2528 = vcmp.lt.s32.totalorder %v2521, %v2300
      %v2529 = vsel %vm2528, %v2521, %v2300
      %vm2530 = vcmp.lt.s32.totalorder %v2523, %v2301
      %v2531 = vsel %vm2530, %v2523, %v2301
      %vm2532 = vcmp.lt.s32.totalorder %v2525, %v2302
      %v2533 = vsel %vm2532, %v2525, %v2302
      %vm2534 = vcmp.lt.s32.totalorder %v2527, %v2303
      %v2535 = vsel %vm2534, %v2527, %v2303
      %vm2536 = vcmp.lt.s32.totalorder %v2529, %v2304
      %v2537 = vsel %vm2536, %v2529, %v2304
      %vm2538 = vcmp.lt.s32.totalorder %v2531, %v2305
      %v2539 = vsel %vm2538, %v2531, %v2305
      %vm2540 = vcmp.lt.s32.totalorder %v2533, %v2306
      %v2541 = vsel %vm2540, %v2533, %v2306
      %vm2542 = vcmp.lt.s32.totalorder %v2535, %v2307
      %v2543 = vsel %vm2542, %v2535, %v2307
      %vm2544 = vcmp.lt.s32.totalorder %v2537, %v2308
      %v2545 = vsel %vm2544, %v2537, %v2308
      %vm2546 = vcmp.lt.s32.totalorder %v2539, %v2309
      %v2547 = vsel %vm2546, %v2539, %v2309
      %vm2548 = vcmp.lt.s32.totalorder %v2541, %v2310
      %v2549 = vsel %vm2548, %v2541, %v2310
      %vm2550 = vcmp.lt.s32.totalorder %v2543, %v2311
      %v2551 = vsel %vm2550, %v2543, %v2311
      %vm2552 = vcmp.lt.s32.totalorder %v2545, %v2312
      %v2553 = vsel %vm2552, %v2545, %v2312
      %vm2554 = vcmp.lt.s32.totalorder %v2547, %v2313
      %v2555 = vsel %vm2554, %v2547, %v2313
      %vm2556 = vcmp.lt.s32.totalorder %v2549, %v2314
      %v2557 = vsel %vm2556, %v2549, %v2314
      %vm2558 = vcmp.lt.s32.totalorder %v2551, %v2315
      %v2559 = vsel %vm2558, %v2551, %v2315
      %vm2560 = vcmp.lt.s32.totalorder %v2553, %v2316
      %v2561 = vsel %vm2560, %v2553, %v2316
      %vm2562 = vcmp.lt.s32.totalorder %v2555, %v2317
      %v2563 = vsel %vm2562, %v2555, %v2317
      %vm2564 = vcmp.lt.s32.totalorder %v2557, %v2318
      %v2565 = vsel %vm2564, %v2557, %v2318
      %vm2566 = vcmp.lt.s32.totalorder %v2559, %v2319
      %v2567 = vsel %vm2566, %v2559, %v2319
      %vm2568 = vcmp.lt.s32.totalorder %v2561, %v2563
      %v2569 = vsel %vm2568, %v2561, %v2563
      %vm2570 = vcmp.lt.s32.totalorder %v2565, %v2567
      %v2571 = vsel %vm2570, %v2565, %v2567
      %vm2572 = vcmp.lt.s32.totalorder %v2569, %v2571
      %v2573 = vsel %vm2572, %v2569, %v2571
      %v2574 = vrot.slane %v2573, 4
      %vm2575 = vcmp.lt.s32.totalorder %v2573, %v2574
      %v2576 = vsel %vm2575, %v2573, %v2574
      %v2577 = vrot.slane %v2576, 2
      %vm2578 = vcmp.lt.s32.totalorder %v2576, %v2577
      %v2579 = vsel %vm2578, %v2576, %v2577
      %v2580 = vrot.slane %v2579, 1
      %vm2581 = vcmp.lt.s32.totalorder %v2579, %v2580
      %v2582 = vsel %vm2581, %v2579, %v2580
      %v2583 = vld [vmem:[#allocation2] sm:$0x1]
      %vm2584 = vcmp.gt.f32.partialorder %v2063, %v2583
      %v2585 = vld [vmem:[#allocation3] sm:$0x1]
      %v2586 = vsel %vm2584, %v2582, %v2585
      %2587 = vst [vmem:[#allocation3] sm:$0x1] %v2586
      %v2588 = vld [vmem:[#allocation2] sm:$0x1]
      %v2589 = vsel %vm2584, %v2063, %v2588
      %2590 = vst [vmem:[#allocation2] sm:$0x1] %v2589
      %p2591 = scmp.eq.s32.totalorder %s20, 1
      // Predicated region
      $region33: #{_greedy_decode.1} parent=27 // pred_check
        %p2592 = pneg %p2591
      $region34: #{_greedy_decode.1} parent=27 // pred_check_branch
        %2594 = sbr.rel (%p2592) target = $region36
      $region35: #{_greedy_decode.1} parent=27 // pred_region
        %v2595 = vld [vmem:[#allocation3] sm:$0x1]
        %2596 = vst [vmem:[%s203] sm:$0x1] %v2595
        %v2597 = vld [vmem:[#allocation2] sm:$0x1]
        %2598 = vst [vmem:[%s206] sm:$0x1] %v2597
      $region36: #{_greedy_decode.1} parent=27 // pred_fallthru
        _
      %p2599 = scmp.lt.s32.totalorder %s19, 0
      %s2600 = scalar_select %p2599, %s19, 0
      %s2601 = scalar_lea.vmem %s2, %s2600
      %p2602 = scmp.lt.s32.totalorder %s19, 0
      %s2603 = scalar_select %p2602, %s19, 0
      %s2604 = scalar_lea.vmem %s3, %s2603
      // Predicated region
      $region37: #{_greedy_decode.1} parent=27 // pred_check
        %p2605 = pneg %p97
      $region38: #{_greedy_decode.1} parent=27 // pred_check_branch
        %2607 = sbr.rel (%p2605) target = $region40
      $region39: #{_greedy_decode.1} parent=27 // pred_region
        _
      $region40: #{_greedy_decode.1} parent=27 // pred_fallthru
        _
      // Predicated region
      $region41: #{_greedy_decode.1} parent=27 // pred_check
        %p2608 = pneg %p123
      $region42: #{_greedy_decode.1} parent=27 // pred_check_branch
        %2610 = sbr.rel (%p2608) target = $region44
      $region43: #{_greedy_decode.1} parent=27 // pred_region
        _
      $region44: #{_greedy_decode.1} parent=27 // pred_fallthru
        _
      // Predicated region
      $region45: #{_greedy_decode.1} parent=27 // pred_check
        %p2611 = pneg %p97
      $region46: #{_greedy_decode.1} parent=27 // pred_check_branch
        %2613 = sbr.rel (%p2611) target = $region48
      $region47: #{_greedy_decode.1} parent=27 // pred_region
        %p2614 = scmp.lt.s32.totalorder %s19, 0
        %s2615 = scalar_select %p2614, %s19, 0
        %s2616 = scalar_lea.vmem %s2, %s2615
      $region48: #{_greedy_decode.1} parent=27 // pred_fallthru
        _
      // Predicated region
      $region49: #{_greedy_decode.1} parent=27 // pred_check
        %p2617 = pneg %p123
      $region50: #{_greedy_decode.1} parent=27 // pred_check_branch
        %2619 = sbr.rel (%p2617) target = $region52
      $region51: #{_greedy_decode.1} parent=27 // pred_region
        %p2620 = scmp.lt.s32.totalorder %s19, 0
        %s2621 = scalar_select %p2620, %s19, 0
        %s2622 = scalar_lea.vmem %s3, %s2621
      $region52: #{_greedy_decode.1} parent=27 // pred_fallthru
        _
    $region28: #{_greedy_decode.1} parent=5 // pred_fallthru
      _
    %p2623 = scmp.le.s32.totalorder 2, %s10
    // Predicated region
    $region53: #{_greedy_decode.1} parent=5 // pred_check
      %p2624 = pneg %p2623
    $region54: #{_greedy_decode.1} parent=5 // pred_check_branch
      %2626 = sbr.rel (%p2624) target = $region56
    $region55: #{_greedy_decode.1} parent=5 // pred_region
      %s2627 = ssub.s32 %s10, 2
    $region56: #{_greedy_decode.1} parent=5 // pred_fallthru
      _
  $region6: #{_greedy_decode.1} parent=0 // loop_footer
    %s14 = sadd.s32 1, %s10
  $region7: #{_greedy_decode.1} parent=0 // loop_footer_branch
    %9 = sbr.rel target = $region3
  $region8: #{_greedy_decode.1} parent=0 // loop_exit
    _

</llo_original>
